<compile_context>
chip_gen: v7x
topology: tpu7x:2x2x1
jax: 0.10.0
libtpu: 0.0.40
codegen_flags: <defaults>
</compile_context>

<pallas_src>
import math
import numpy as np
import jax
import jax.numpy as jnp
from jax.experimental import pallas as pl
from jax.experimental.pallas import tpu as pltpu

# ---------------- configuration (SBDFC defaults scaled down, TPU-friendly) ----------------
BATCH = 4
BERT_DIM = 32
VOCAB_DIM = 256
HASH_TAG_DIM = 128
HIDDEN_DIM = 64
HASH_HIDDEN_DIM = 50          # hard-coded in SBDFC._init_params
Z_DIM = 32
N_CLASSES = 2
LEAKY_SLOPE = 0.01            # F.leaky_relu default

# ---- f32 activation slab lane offsets (all 128-aligned), shape (B_pad, D_TOTAL) ----
D_OFF_BERT = 0                # 32 valid lanes (+96 zero)
D_OFF_HASH = 128              # 128
D_OFF_BOW = 256               # 256
D_OFF_EPS1 = 512              # 32 (+96 zero)
D_OFF_EPS2 = 640              # 32 (+96 zero)
D_TOTAL = 768

# ---- bf16 MXU weight slab (128 rows, lane offsets 128-aligned), shape (128, W_TOTAL) ----
W_OFF_BERT = 0                # 256 lanes: [mu1(32)|ls1(32)|xyh_x(64)|cls_fold(2)@128|pad]
W_OFF_HASH = 256              # 128 lanes: hash hidden (50 valid cols)
W_OFF_H2 = 384                # 128 lanes: [mu2(32)|ls2(32)|z2y_fold(2)@64|pad]
W_OFF_DEC = 512               # 512 lanes: blockdiag(W_xt, W_xyt)
W_ROWS = 128
W_TOTAL = 1024
BERT_OUT = 256
HASH_OUT = 128
H2_OUT = 128
DEC_OUT = 2 * VOCAB_DIM
CLS_FOLD = 128                # lane (within bert block) of folded mu_z1 . W_xyc_z (+ bias)
Z2Y_FOLD = 2 * Z_DIM          # lane (within h2 block)   of folded mu_z2 . W_z2y  (+ bias)

# ---- f32 bias / per-class slab, shape (8, P_TOTAL): row 0 = bias, rows 1..2 = class rows ----
B_OFF_BERT = 0                # 256
B_OFF_HASH = 256              # 128
B_OFF_H2 = 384                # 128
B_OFF_DEC = 512               # 512
B_OFF_CT = 1024               # 256
C_OFF_CT = 0                  # 256 : class_topics rows
C_OFF_XYH_Y = 256             # 64  : x_y_hidden y-part rows
C_OFF_XYC_H = 384             # 128 : xy_classifier hash-part rows (50 valid)
C_OFF_Z2Y = 512               # 32  : z2y_classifier rows
P_ROWS = 8
P_TOTAL = 1280

# ---- packed output lane layout ----
OUT_LANES = 128
O_ELBO_XY, O_REC2, O_KLDZ2, O_KLDZ1, O_CLS_TOPIC, O_ELBO_X, O_LOGY, O_YHAT = range(8)


def _leaky_relu(x):
    return jnp.where(x >= 0, x, LEAKY_SLOPE * x)


def _mm(a, b):
    # MXU matmul, bf16 operands, f32 accumulation.
    return jnp.dot(a, b, preferred_element_type=jnp.float32)


def _bow_rec_loss(logits, bow, bow_sum):
    # -(log_softmax(logits) * bow).sum(-1), folded so log_softmax is never materialized:
    #   -sum((x - max) * bow) + log(sum(exp(x - max))) * sum(bow)
    m = jnp.max(logits, axis=-1, keepdims=True)
    s = logits - m
    logz = jnp.log(jnp.sum(jnp.exp(s), axis=-1, keepdims=True))
    return -jnp.sum(s * bow, axis=-1, keepdims=True) + logz * bow_sum


def sbdfc_kernel(data_ref, w_ref, p_ref, out_ref):
    data = data_ref[...]
    pvals = p_ref[...]
    bias = pvals[0:1, :]
    cls0 = pvals[1:2, :]
    cls1 = pvals[2:3, :]

    bow = data[:, D_OFF_BOW:D_OFF_BOW + VOCAB_DIM]
    eps1 = data[:, D_OFF_EPS1:D_OFF_EPS1 + Z_DIM]
    eps2 = data[:, D_OFF_EPS2:D_OFF_EPS2 + Z_DIM]
    bow_sum = jnp.sum(bow, axis=-1, keepdims=True)

    # ---- fused bert-LHS matmul: [mu_z1 | log_sigma_z1 | xyh_x | fold(mu_z1.W_xyc_z + b)] ----
    bert_lhs = data[:, D_OFF_BERT:D_OFF_BERT + 128].astype(jnp.bfloat16)
    bert_out = (_mm(bert_lhs, w_ref[:, W_OFF_BERT:W_OFF_BERT + BERT_OUT])
                + bias[:, B_OFF_BERT:B_OFF_BERT + BERT_OUT])
    mu_z1 = bert_out[:, 0:Z_DIM]
    log_sigma_z1 = bert_out[:, Z_DIM:2 * Z_DIM]
    xyh_from_x = bert_out[:, 2 * Z_DIM:2 * Z_DIM + HIDDEN_DIM]      # b_xyh already included
    l0 = bert_out[:, CLS_FOLD:CLS_FOLD + 1]                         # mu_z1.W_xyc_z[:,0] + b_xyc[0]
    l1 = bert_out[:, CLS_FOLD + 1:CLS_FOLD + 2]

    # ---- hashtag hidden layer (50 valid cols, exact-zero padded to 128) ----
    hash_lhs = data[:, D_OFF_HASH:D_OFF_HASH + HASH_TAG_DIM].astype(jnp.bfloat16)
    hash_hidden = _leaky_relu(
        _mm(hash_lhs, w_ref[:, W_OFF_HASH:W_OFF_HASH + HASH_OUT])
        + bias[:, B_OFF_HASH:B_OFF_HASH + HASH_OUT])

    # ---- xy_classifier on cat(mu_z1, hash_hidden) (eval path); hash part stays on VPU/XLU ----
    l0 = l0 + jnp.sum(hash_hidden * cls0[:, C_OFF_XYC_H:C_OFF_XYC_H + HASH_OUT],
                      axis=-1, keepdims=True)
    l1 = l1 + jnp.sum(hash_hidden * cls1[:, C_OFF_XYC_H:C_OFF_XYC_H + HASH_OUT],
                      axis=-1, keepdims=True)
    m01 = jnp.maximum(l0, l1)
    e0 = jnp.exp(l0 - m01)
    e1 = jnp.exp(l1 - m01)
    inv = 1.0 / (e0 + e1)
    p0 = e0 * inv                       # y_hat[:, 0]
    p1 = e1 * inv                       # y_hat[:, 1]

    # ---- z1 posterior: sigma computed once, reused by sample + KLD ----
    sigma_z1 = jnp.exp(log_sigma_z1)
    kldz1 = -0.5 * jnp.sum(1.0 - mu_z1 * mu_z1 + 2.0 * log_sigma_z1 - sigma_z1 * sigma_z1,
                           axis=-1, keepdims=True)
    z1 = eps1 * sigma_z1 + mu_z1

    # ---- class_topics: K=2 contraction as broadcast FMAs ----
    ct_logits = (p0 * cls0[:, C_OFF_CT:C_OFF_CT + VOCAB_DIM]
                 + p1 * cls1[:, C_OFF_CT:C_OFF_CT + VOCAB_DIM]
                 + bias[:, B_OFF_CT:B_OFF_CT + VOCAB_DIM])
    class_topic_rec_loss = _bow_rec_loss(ct_logits, bow, bow_sum)

    # ---- x_y_hidden = leaky_relu(bert part (bias included) + y_hat part via FMAs) ----
    x_y_hidden = _leaky_relu(
        xyh_from_x
        + p0 * cls0[:, C_OFF_XYH_Y:C_OFF_XYH_Y + HIDDEN_DIM]
        + p1 * cls1[:, C_OFF_XYH_Y:C_OFF_XYH_Y + HIDDEN_DIM])

    # ---- fused x_y_hidden-LHS matmul: [mu_z2 | log_sigma_z2 | fold(mu_z2.W_z2y + b_z2y)] ----
    h2_out = (_mm(x_y_hidden.astype(jnp.bfloat16),
                  w_ref[0:HIDDEN_DIM, W_OFF_H2:W_OFF_H2 + H2_OUT])
              + bias[:, B_OFF_H2:B_OFF_H2 + H2_OUT])
    mu_z2 = h2_out[:, 0:Z_DIM]
    log_sigma_z2 = h2_out[:, Z_DIM:2 * Z_DIM]
    r0_mu = h2_out[:, Z2Y_FOLD:Z2Y_FOLD + 1]
    r1_mu = h2_out[:, Z2Y_FOLD + 1:Z2Y_FOLD + 2]
    sigma_z2 = jnp.exp(log_sigma_z2)
    kldz2 = -0.5 * jnp.sum(1.0 - mu_z2 * mu_z2 + 2.0 * log_sigma_z2 - sigma_z2 * sigma_z2,
                           axis=-1, keepdims=True)
    dz2 = eps2 * sigma_z2               # z2 - mu_z2
    z2 = mu_z2 + dz2

    # ---- fused block-diagonal decoders: [x_only_topics(z1) | xy_topics(z2)] ----
    zcat = jnp.concatenate([z1, z2], axis=-1).astype(jnp.bfloat16)
    dec = (_mm(zcat, w_ref[0:2 * Z_DIM, W_OFF_DEC:W_OFF_DEC + DEC_OUT])
           + bias[:, B_OFF_DEC:B_OFF_DEC + DEC_OUT])
    rec_loss_z1 = _bow_rec_loss(dec[:, 0:VOCAB_DIM], bow, bow_sum)
    rec_loss_z2 = _bow_rec_loss(dec[:, VOCAB_DIM:DEC_OUT], bow, bow_sum)

    # ---- z2y_classifier: mu part folded into h2_out; eps*sigma part on VPU/XLU ----
    r0 = r0_mu + jnp.sum(dz2 * cls0[:, C_OFF_Z2Y:C_OFF_Z2Y + Z_DIM], axis=-1, keepdims=True)
    r1 = r1_mu + jnp.sum(dz2 * cls1[:, C_OFF_Z2Y:C_OFF_Z2Y + Z_DIM], axis=-1, keepdims=True)
    rm = jnp.maximum(r0, r1)
    lse = rm + jnp.log(jnp.exp(r0 - rm) + jnp.exp(r1 - rm))
    log_y_hat_rec_loss = -((r0 - lse) * p0 + (r1 - lse) * p1)

    elbo_z1 = kldz1 + rec_loss_z1
    elbo_z2 = kldz2 + rec_loss_z2 + log_y_hat_rec_loss

    # ---- single lane-dense full-width store (no masked single-lane stores) ----
    pad = jnp.zeros((out_ref.shape[0], OUT_LANES - 9), jnp.float32)
    out_ref[...] = jnp.concatenate(
        [elbo_z2, rec_loss_z2, kldz2, kldz1, class_topic_rec_loss,
         elbo_z1, log_y_hat_rec_loss, l0, l1, pad], axis=-1)


@jax.jit
def sbdfc_forward(bert_rep, hash_matrix, bow, eps1, eps2, params):
    """Eval-mode SBDFC.forward (self.training == False, n_samples == 1); eps1/eps2 are the
    externally supplied Gaussian draws for the z1/z2 reparameterized samples."""
    w_slab, p_slab = params
    B = bert_rep.shape[0]
    B_pad = ((B + 15) // 16) * 16          # bf16 LHS: 16 rows per packed sublane group

    def lanes(x, width):
        return jnp.pad(x, ((0, 0), (0, width - x.shape[1])))

    data = jnp.concatenate(
        [lanes(bert_rep, 128), hash_matrix, bow, lanes(eps1, 128), lanes(eps2, 128)], axis=1)
    data = jnp.pad(data, ((0, B_pad - B), (0, 0)))          # (B_pad, 768) f32, one DMA

    flops = 2 * B_pad * (128 * BERT_OUT + 128 * HASH_OUT + HIDDEN_DIM * H2_OUT
                         + 2 * Z_DIM * DEC_OUT)
    transcendentals = B_pad * (DEC_OUT + VOCAB_DIM + 2 * Z_DIM + 16)
    bytes_accessed = (data.size * 4 + w_slab.size * 2 + p_slab.size * 4
                      + B_pad * OUT_LANES * 4)

    packed = pl.pallas_call(
        sbdfc_kernel,
        out_shape=jax.ShapeDtypeStruct((B_pad, OUT_LANES), jnp.float32),
        grid=(1,),
        in_specs=[
            pl.BlockSpec((B_pad, D_TOTAL), lambda i: (0, 0)),
            pl.BlockSpec((W_ROWS, W_TOTAL), lambda i: (0, 0)),
            pl.BlockSpec((P_ROWS, P_TOTAL), lambda i: (0, 0)),
        ],
        out_specs=pl.BlockSpec((B_pad, OUT_LANES), lambda i: (0, 0)),
        compiler_params=pltpu.CompilerParams(dimension_semantics=("arbitrary",)),
        cost_estimate=pl.CostEstimate(flops=flops, transcendentals=transcendentals,
                                      bytes_accessed=bytes_accessed),
    )(data, w_slab, p_slab)

    out = packed[:B]                         # padded rows hold finite garbage; drop before sums
    elbo_z2 = out[:, O_ELBO_XY]
    rec_loss_z2 = out[:, O_REC2]
    kldz2 = out[:, O_KLDZ2]
    kldz1 = out[:, O_KLDZ1]
    class_topic = out[:, O_CLS_TOPIC]
    elbo_z1 = out[:, O_ELBO_X]
    logy = out[:, O_LOGY]
    y_hat_logis = out[:, O_YHAT:O_YHAT + N_CLASSES]

    # classifier_loss == 0 in eval mode, so total_loss reduces to the three ELBO sums.
    total = jnp.sum(elbo_z1) + jnp.sum(elbo_z2) + jnp.sum(class_topic)
    return {
        "loss": total,
        "elbo_xy": elbo_z2,
        "rec_loss": rec_loss_z2,
        "kldz2": kldz2,
        "kldz1": kldz1,
        "cls_loss": jnp.float32(0.0),        # eval mode: classifier_loss == 0
        "class_topic_loss": class_topic,
        "y_hat": y_hat_logis,
        "elbo_x": elbo_z1,
        "log_y_hat_rec_loss": jnp.sum(logy),
    }


def init_params(key):
    """Torch-style init (U(-1/sqrt(fan_in))); log_sigma weights/biases zeroed as in
    reset_parameters().  Returns (packed_kernel_params, raw_f32_weight_dict)."""
    def linear(k, fan_in, fan_out):
        bound = 1.0 / math.sqrt(fan_in)
        kw, kb = jax.random.split(k)
        w = jax.random.uniform(kw, (fan_in, fan_out), jnp.float32, -bound, bound)
        b = jax.random.uniform(kb, (fan_out,), jnp.float32, -bound, bound)
        return w, b

    keys = jax.random.split(key, 9)
    w_hash, b_hash = linear(keys[0], HASH_TAG_DIM, HASH_HIDDEN_DIM)
    w_mu1, b_mu1 = linear(keys[1], BERT_DIM, Z_DIM)
    w_ls1 = jnp.zeros((BERT_DIM, Z_DIM), jnp.float32)           # reset_parameters()
    b_ls1 = jnp.zeros((Z_DIM,), jnp.float32)
    w_xt, b_xt = linear(keys[2], Z_DIM, VOCAB_DIM)
    w_xyc, b_xyc = linear(keys[3], Z_DIM + HASH_HIDDEN_DIM, N_CLASSES)
    w_ct, b_ct = linear(keys[4], N_CLASSES, VOCAB_DIM)
    w_xyh, b_xyh = linear(keys[5], BERT_DIM + N_CLASSES, HIDDEN_DIM)
    w_mu2, b_mu2 = linear(keys[6], HIDDEN_DIM, Z_DIM)
    w_ls2 = jnp.zeros((HIDDEN_DIM, Z_DIM), jnp.float32)         # reset_parameters()
    b_ls2 = jnp.zeros((Z_DIM,), jnp.float32)
    w_xyt, b_xyt = linear(keys[7], Z_DIM, VOCAB_DIM)
    w_z2y, b_z2y = linear(keys[8], Z_DIM, N_CLASSES)

    raw = dict(w_hash=w_hash, b_hash=b_hash, w_mu1=w_mu1, b_mu1=b_mu1, w_ls1=w_ls1, b_ls1=b_ls1,
               w_xt=w_xt, b_xt=b_xt, w_xyc=w_xyc, b_xyc=b_xyc, w_ct=w_ct, b_ct=b_ct,
               w_xyh=w_xyh, b_xyh=b_xyh, w_mu2=w_mu2, b_mu2=b_mu2, w_ls2=w_ls2, b_ls2=b_ls2,
               w_xyt=w_xyt, b_xyt=b_xyt, w_z2y=w_z2y, b_z2y=b_z2y)

    # offline algebraic folds (eval path uses mu_z1 for the classifier, so these are exact):
    #   mu_z1 @ W_xyc_z + b_xyc == bert @ (w_mu1 @ W_xyc_z) + (b_mu1 @ W_xyc_z + b_xyc)
    #   mu_z2 @ W_z2y  + b_z2y  == xyh  @ (w_mu2 @ W_z2y)   + (b_mu2 @ W_z2y  + b_z2y)
    w_xyc_z = w_xyc[:Z_DIM]
    w_xyc_h = w_xyc[Z_DIM:]
    cls_fold_w = w_mu1 @ w_xyc_z
    cls_fold_b = b_mu1 @ w_xyc_z + b_xyc
    z2y_fold_w = w_mu2 @ w_z2y
    z2y_fold_b = b_mu2 @ w_z2y + b_z2y

    # ---- bf16 MXU weight slab [128, 1024] ----
    w_slab = jnp.zeros((W_ROWS, W_TOTAL), jnp.float32)
    w_slab = w_slab.at[:BERT_DIM, W_OFF_BERT + 0:W_OFF_BERT + Z_DIM].set(w_mu1)
    w_slab = w_slab.at[:BERT_DIM, W_OFF_BERT + Z_DIM:W_OFF_BERT + 2 * Z_DIM].set(w_ls1)
    w_slab = w_slab.at[:BERT_DIM,
                       W_OFF_BERT + 2 * Z_DIM:W_OFF_BERT + 2 * Z_DIM + HIDDEN_DIM].set(w_xyh[:BERT_DIM])
    w_slab = w_slab.at[:BERT_DIM,
                       W_OFF_BERT + CLS_FOLD:W_OFF_BERT + CLS_FOLD + N_CLASSES].set(cls_fold_w)
    w_slab = w_slab.at[:HASH_TAG_DIM, W_OFF_HASH:W_OFF_HASH + HASH_HIDDEN_DIM].set(w_hash)
    w_slab = w_slab.at[:HIDDEN_DIM, W_OFF_H2 + 0:W_OFF_H2 + Z_DIM].set(w_mu2)
    w_slab = w_slab.at[:HIDDEN_DIM, W_OFF_H2 + Z_DIM:W_OFF_H2 + 2 * Z_DIM].set(w_ls2)
    w_slab = w_slab.at[:HIDDEN_DIM,
                       W_OFF_H2 + Z2Y_FOLD:W_OFF_H2 + Z2Y_FOLD + N_CLASSES].set(z2y_fold_w)
    w_slab = w_slab.at[:Z_DIM, W_OFF_DEC:W_OFF_DEC + VOCAB_DIM].set(w_xt)
    w_slab = w_slab.at[Z_DIM:2 * Z_DIM,
                       W_OFF_DEC + VOCAB_DIM:W_OFF_DEC + 2 * VOCAB_DIM].set(w_xyt)
    w_slab = w_slab.astype(jnp.bfloat16)

    # ---- f32 bias / per-class slab [8, 1280] (row 0 bias, rows 1..2 class rows) ----
    p_slab = jnp.zeros((P_ROWS, P_TOTAL), jnp.float32)
    p_slab = p_slab.at[0, B_OFF_BERT + 0:B_OFF_BERT + Z_DIM].set(b_mu1)
    p_slab = p_slab.at[0, B_OFF_BERT + Z_DIM:B_OFF_BERT + 2 * Z_DIM].set(b_ls1)
    p_slab = p_slab.at[0, B_OFF_BERT + 2 * Z_DIM:B_OFF_BERT + 2 * Z_DIM + HIDDEN_DIM].set(b_xyh)
    p_slab = p_slab.at[0, B_OFF_BERT + CLS_FOLD:B_OFF_BERT + CLS_FOLD + N_CLASSES].set(cls_fold_b)
    p_slab = p_slab.at[0, B_OFF_HASH:B_OFF_HASH + HASH_HIDDEN_DIM].set(b_hash)
    p_slab = p_slab.at[0, B_OFF_H2 + 0:B_OFF_H2 + Z_DIM].set(b_mu2)
    p_slab = p_slab.at[0, B_OFF_H2 + Z_DIM:B_OFF_H2 + 2 * Z_DIM].set(b_ls2)
    p_slab = p_slab.at[0, B_OFF_H2 + Z2Y_FOLD:B_OFF_H2 + Z2Y_FOLD + N_CLASSES].set(z2y_fold_b)
    p_slab = p_slab.at[0, B_OFF_DEC:B_OFF_DEC + VOCAB_DIM].set(b_xt)
    p_slab = p_slab.at[0, B_OFF_DEC + VOCAB_DIM:B_OFF_DEC + 2 * VOCAB_DIM].set(b_xyt)
    p_slab = p_slab.at[0, B_OFF_CT:B_OFF_CT + VOCAB_DIM].set(b_ct)
    p_slab = p_slab.at[1:3, C_OFF_CT:C_OFF_CT + VOCAB_DIM].set(w_ct)
    p_slab = p_slab.at[1:3, C_OFF_XYH_Y:C_OFF_XYH_Y + HIDDEN_DIM].set(w_xyh[BERT_DIM:])
    p_slab = p_slab.at[1:3, C_OFF_XYC_H:C_OFF_XYC_H + HASH_HIDDEN_DIM].set(w_xyc_h.T)
    p_slab = p_slab.at[1:3, C_OFF_Z2Y:C_OFF_Z2Y + Z_DIM].set(w_z2y.T)

    return (w_slab, p_slab), raw


def sbdfc_reference(bert_rep, hash_matrix, bow, eps1, eps2, raw):
    """Pure-JAX f32 reference mirroring the torch eval-mode forward (same eps draws)."""
    lrelu = lambda x: jnp.where(x >= 0, x, LEAKY_SLOPE * x)
    lsm = jax.nn.log_softmax
    hash_hidden = lrelu(hash_matrix @ raw["w_hash"] + raw["b_hash"])
    mu_z1 = bert_rep @ raw["w_mu1"] + raw["b_mu1"]
    log_sigma_z1 = bert_rep @ raw["w_ls1"] + raw["b_ls1"]
    kldz1 = -0.5 * jnp.sum(1 - mu_z1 ** 2 + 2 * log_sigma_z1 - jnp.exp(2 * log_sigma_z1), -1)
    z1 = eps1 * jnp.exp(log_sigma_z1) + mu_z1
    log_probz1 = lsm(z1 @ raw["w_xt"] + raw["b_xt"], axis=-1)
    zhash = jnp.concatenate([mu_z1, hash_hidden], axis=-1)
    y_hat_logis = zhash @ raw["w_xyc"] + raw["b_xyc"]
    y_hat = jax.nn.softmax(y_hat_logis, axis=-1)
    rec_loss_z1 = -jnp.sum(log_probz1 * bow, -1)
    log_prob_ct = lsm(y_hat @ raw["w_ct"] + raw["b_ct"], axis=-1)
    class_topic_rec_loss = -jnp.sum(log_prob_ct * bow, -1)
    y_hat_x = jnp.concatenate([bert_rep, y_hat], axis=-1)
    x_y_hidden = lrelu(y_hat_x @ raw["w_xyh"] + raw["b_xyh"])
    mu_z2 = x_y_hidden @ raw["w_mu2"] + raw["b_mu2"]
    log_sigma_z2 = x_y_hidden @ raw["w_ls2"] + raw["b_ls2"]
    z2 = eps2 * jnp.exp(log_sigma_z2) + mu_z2
    log_probz2 = lsm(z2 @ raw["w_xyt"] + raw["b_xyt"], axis=-1)
    log_y_hat_rec = lsm(z2 @ raw["w_z2y"] + raw["b_z2y"], axis=-1)
    kldz2 = -0.5 * jnp.sum(1 - mu_z2 ** 2 + 2 * log_sigma_z2 - jnp.exp(2 * log_sigma_z2), -1)
    rec_loss_z2 = -jnp.sum(log_probz2 * bow, -1)
    log_y_hat_rec_loss = -jnp.sum(log_y_hat_rec * y_hat, -1)
    elbo_z1 = kldz1 + rec_loss_z1
    elbo_z2 = kldz2 + rec_loss_z2 + log_y_hat_rec_loss
    total = elbo_z1.sum() + elbo_z2.sum() + class_topic_rec_loss.sum()
    return {"loss": total, "elbo_xy": elbo_z2, "rec_loss": rec_loss_z2, "kldz2": kldz2,
            "kldz1": kldz1, "cls_loss": jnp.float32(0.0),
            "class_topic_loss": class_topic_rec_loss, "y_hat": y_hat_logis,
            "elbo_x": elbo_z1, "log_y_hat_rec_loss": log_y_hat_rec_loss.sum()}


if __name__ == "__main__":
    key = jax.random.PRNGKey(0)
    k_param, k_bert, k_hash, k_bow, k_e1, k_e2 = jax.random.split(key, 6)

    params, raw = init_params(k_param)

    # batchItem analogues: BERT [CLS] rep, bag-of-words counts, hashtag indicator matrix;
    # eps1/eps2 = the Gaussian draws used by the reparameterized z1/z2 samples.
    bert_rep = jax.random.normal(k_bert, (BATCH, BERT_DIM), jnp.float32)
    hash_matrix = (jax.random.uniform(k_hash, (BATCH, HASH_TAG_DIM)) < 0.1).astype(jnp.float32)
    bow = jnp.floor(jax.random.uniform(k_bow, (BATCH, VOCAB_DIM)) * 3.0).astype(jnp.float32)
    eps1 = jax.random.normal(k_e1, (BATCH, Z_DIM), jnp.float32)
    eps2 = jax.random.normal(k_e2, (BATCH, Z_DIM), jnp.float32)

    out = sbdfc_forward(bert_rep, hash_matrix, bow, eps1, eps2, params)
    out = jax.block_until_ready(out)

    # loose-tolerance check vs. a pure-f32 JAX reference (kernel uses bf16 MXU operands).
    ref = sbdfc_reference(bert_rep, hash_matrix, bow, eps1, eps2, raw)
    for name in ("loss", "elbo_xy", "rec_loss", "kldz2", "kldz1", "class_topic_loss",
                 "y_hat", "elbo_x", "log_y_hat_rec_loss"):
        np.testing.assert_allclose(np.asarray(out[name]), np.asarray(ref[name]),
                                   rtol=5e-2, atol=2e-1)

    print("KERNEL_OK")
</pallas_src>

<mosaic_0001>
module attributes {stable_mosaic.version = 11 : i64} {
  func.func @sbdfc_kernel(%arg0: i32, %arg1: memref<16x768xf32, #tpu.memory_space<vmem>>, %arg2: memref<128x1024xbf16, #tpu.memory_space<vmem>>, %arg3: memref<8x1280xf32, #tpu.memory_space<vmem>>, %arg4: memref<16x128xf32, #tpu.memory_space<vmem>>) attributes {dimension_semantics = [#tpu.dimension_semantics<arbitrary>], iteration_bounds = array<i64: 1>, scalar_prefetch = 0 : i64, scratch_operands = 0 : i64, tpu.core_type = #tpu.core_type<tc>, window_params = [{pipeline_mode = #tpu.pipeline_mode<synchronous>, transform_indices = @transform_0, window_bounds = array<i64: 16, 768>}, {pipeline_mode = #tpu.pipeline_mode<synchronous>, transform_indices = @transform_1, window_bounds = array<i64: 128, 1024>}, {pipeline_mode = #tpu.pipeline_mode<synchronous>, transform_indices = @transform_2, window_bounds = array<i64: 8, 1280>}, {pipeline_mode = #tpu.pipeline_mode<synchronous>, transform_indices = @transform_3, window_bounds = array<i64: 16, 128>}]} {
    %c0 = arith.constant 0 : index
    %c0_0 = arith.constant 0 : index
    %0 = vector.load %arg1[%c0, %c0_0] : memref<16x768xf32, #tpu.memory_space<vmem>>, vector<16x768xf32>
    %c0_1 = arith.constant 0 : index
    %c0_2 = arith.constant 0 : index
    %1 = vector.load %arg3[%c0_1, %c0_2] : memref<8x1280xf32, #tpu.memory_space<vmem>>, vector<8x1280xf32>
    %2 = vector.extract_strided_slice %1 {offsets = [0, 0], sizes = [1, 1280], strides = [1, 1]} : vector<8x1280xf32> to vector<1x1280xf32>
    %3 = vector.extract_strided_slice %1 {offsets = [1, 0], sizes = [1, 1280], strides = [1, 1]} : vector<8x1280xf32> to vector<1x1280xf32>
    %4 = vector.extract_strided_slice %1 {offsets = [2, 0], sizes = [1, 1280], strides = [1, 1]} : vector<8x1280xf32> to vector<1x1280xf32>
    %5 = vector.extract_strided_slice %0 {offsets = [0, 256], sizes = [16, 256], strides = [1, 1]} : vector<16x768xf32> to vector<16x256xf32>
    %6 = vector.extract_strided_slice %0 {offsets = [0, 512], sizes = [16, 32], strides = [1, 1]} : vector<16x768xf32> to vector<16x32xf32>
    %7 = vector.extract_strided_slice %0 {offsets = [0, 640], sizes = [16, 32], strides = [1, 1]} : vector<16x768xf32> to vector<16x32xf32>
    %cst = arith.constant dense<0.000000e+00> : vector<16xf32>
    %8 = vector.multi_reduction <add>, %5, %cst [1] : vector<16x256xf32> to vector<16xf32>
    %9 = vector.shape_cast %8 : vector<16xf32> to vector<16x1xf32>
    %10 = vector.extract_strided_slice %0 {offsets = [0, 0], sizes = [16, 128], strides = [1, 1]} : vector<16x768xf32> to vector<16x128xf32>
    %11 = arith.truncf %10 : vector<16x128xf32> to vector<16x128xbf16>
    %c0_3 = arith.constant 0 : index
    %c0_4 = arith.constant 0 : index
    %12 = vector.load %arg2[%c0_3, %c0_4] : memref<128x1024xbf16, #tpu.memory_space<vmem>>, vector<128x256xbf16>
    %cst_5 = arith.constant dense<0.000000e+00> : vector<16x256xf32>
    %13 = tpu.matmul %11, %12, %cst_5 {dimension_numbers = #tpu.dot_dimension_numbers<[1], [0], [0], [1], [0, 0, 1, 1], [], []>} : vector<16x128xbf16>, vector<128x256xbf16>, vector<16x256xf32> -> vector<16x256xf32>
    %14 = vector.extract_strided_slice %2 {offsets = [0, 0], sizes = [1, 256], strides = [1, 1]} : vector<1x1280xf32> to vector<1x256xf32>
    %15 = vector.broadcast %14 : vector<1x256xf32> to vector<16x256xf32>
    %16 = arith.addf %13, %15 : vector<16x256xf32>
    %17 = vector.extract_strided_slice %16 {offsets = [0, 0], sizes = [16, 32], strides = [1, 1]} : vector<16x256xf32> to vector<16x32xf32>
    %18 = vector.extract_strided_slice %16 {offsets = [0, 32], sizes = [16, 32], strides = [1, 1]} : vector<16x256xf32> to vector<16x32xf32>
    %19 = vector.extract_strided_slice %16 {offsets = [0, 64], sizes = [16, 64], strides = [1, 1]} : vector<16x256xf32> to vector<16x64xf32>
    %20 = vector.extract_strided_slice %16 {offsets = [0, 128], sizes = [16, 1], strides = [1, 1]} : vector<16x256xf32> to vector<16x1xf32>
    %21 = vector.extract_strided_slice %16 {offsets = [0, 129], sizes = [16, 1], strides = [1, 1]} : vector<16x256xf32> to vector<16x1xf32>
    %22 = vector.extract_strided_slice %0 {offsets = [0, 128], sizes = [16, 128], strides = [1, 1]} : vector<16x768xf32> to vector<16x128xf32>
    %23 = arith.truncf %22 : vector<16x128xf32> to vector<16x128xbf16>
    %c0_6 = arith.constant 0 : index
    %c256 = arith.constant 256 : index
    %24 = vector.load %arg2[%c0_6, %c256] : memref<128x1024xbf16, #tpu.memory_space<vmem>>, vector<128x128xbf16>
    %cst_7 = arith.constant dense<0.000000e+00> : vector<16x128xf32>
    %25 = tpu.matmul %23, %24, %cst_7 {dimension_numbers = #tpu.dot_dimension_numbers<[1], [0], [0], [1], [0, 0, 1, 1], [], []>} : vector<16x128xbf16>, vector<128x128xbf16>, vector<16x128xf32> -> vector<16x128xf32>
    %26 = vector.extract_strided_slice %2 {offsets = [0, 256], sizes = [1, 128], strides = [1, 1]} : vector<1x1280xf32> to vector<1x128xf32>
    %27 = vector.broadcast %26 : vector<1x128xf32> to vector<16x128xf32>
    %28 = arith.addf %25, %27 : vector<16x128xf32>
    %cst_8 = arith.constant 0.000000e+00 : f32
    %29 = vector.broadcast %cst_8 : f32 to vector<16x128xf32>
    %30 = arith.cmpf oge, %28, %29 : vector<16x128xf32>
    %cst_9 = arith.constant 0.00999999977 : f32
    %31 = vector.broadcast %cst_9 : f32 to vector<16x128xf32>
    %32 = arith.mulf %31, %28 : vector<16x128xf32>
    %33 = arith.select %30, %28, %32 : vector<16x128xi1>, vector<16x128xf32>
    %34 = vector.extract_strided_slice %3 {offsets = [0, 384], sizes = [1, 128], strides = [1, 1]} : vector<1x1280xf32> to vector<1x128xf32>
    %35 = vector.broadcast %34 : vector<1x128xf32> to vector<16x128xf32>
    %36 = arith.mulf %33, %35 : vector<16x128xf32>
    %cst_10 = arith.constant dense<0.000000e+00> : vector<16xf32>
    %37 = vector.multi_reduction <add>, %36, %cst_10 [1] : vector<16x128xf32> to vector<16xf32>
    %38 = vector.shape_cast %37 : vector<16xf32> to vector<16x1xf32>
    %39 = arith.addf %20, %38 : vector<16x1xf32>
    %40 = vector.extract_strided_slice %4 {offsets = [0, 384], sizes = [1, 128], strides = [1, 1]} : vector<1x1280xf32> to vector<1x128xf32>
    %41 = vector.broadcast %40 : vector<1x128xf32> to vector<16x128xf32>
    %42 = arith.mulf %33, %41 : vector<16x128xf32>
    %cst_11 = arith.constant dense<0.000000e+00> : vector<16xf32>
    %43 = vector.multi_reduction <add>, %42, %cst_11 [1] : vector<16x128xf32> to vector<16xf32>
    %44 = vector.shape_cast %43 : vector<16xf32> to vector<16x1xf32>
    %45 = arith.addf %21, %44 : vector<16x1xf32>
    %46 = arith.maximumf %39, %45 : vector<16x1xf32>
    %47 = arith.subf %39, %46 : vector<16x1xf32>
    %48 = math.exp %47 : vector<16x1xf32>
    %49 = arith.subf %45, %46 : vector<16x1xf32>
    %50 = math.exp %49 : vector<16x1xf32>
    %51 = arith.addf %48, %50 : vector<16x1xf32>
    %cst_12 = arith.constant 1.000000e+00 : f32
    %52 = vector.broadcast %cst_12 : f32 to vector<16x1xf32>
    %53 = arith.divf %52, %51 : vector<16x1xf32>
    %54 = arith.mulf %48, %53 : vector<16x1xf32>
    %55 = arith.mulf %50, %53 : vector<16x1xf32>
    %56 = math.exp %18 : vector<16x32xf32>
    %57 = arith.mulf %17, %17 : vector<16x32xf32>
    %cst_13 = arith.constant 1.000000e+00 : f32
    %58 = vector.broadcast %cst_13 : f32 to vector<16x32xf32>
    %59 = arith.subf %58, %57 : vector<16x32xf32>
    %cst_14 = arith.constant 2.000000e+00 : f32
    %60 = vector.broadcast %cst_14 : f32 to vector<16x32xf32>
    %61 = arith.mulf %60, %18 : vector<16x32xf32>
    %62 = arith.addf %59, %61 : vector<16x32xf32>
    %63 = arith.mulf %56, %56 : vector<16x32xf32>
    %64 = arith.subf %62, %63 : vector<16x32xf32>
    %cst_15 = arith.constant dense<0.000000e+00> : vector<16xf32>
    %65 = vector.multi_reduction <add>, %64, %cst_15 [1] : vector<16x32xf32> to vector<16xf32>
    %66 = vector.shape_cast %65 : vector<16xf32> to vector<16x1xf32>
    %cst_16 = arith.constant -5.000000e-01 : f32
    %67 = vector.broadcast %cst_16 : f32 to vector<16x1xf32>
    %68 = arith.mulf %67, %66 : vector<16x1xf32>
    %69 = arith.mulf %6, %56 : vector<16x32xf32>
    %70 = arith.addf %69, %17 : vector<16x32xf32>
    %71 = vector.extract_strided_slice %3 {offsets = [0, 0], sizes = [1, 256], strides = [1, 1]} : vector<1x1280xf32> to vector<1x256xf32>
    %72 = vector.broadcast %54 : vector<16x1xf32> to vector<16x256xf32>
    %73 = vector.broadcast %71 : vector<1x256xf32> to vector<16x256xf32>
    %74 = arith.mulf %72, %73 : vector<16x256xf32>
    %75 = vector.extract_strided_slice %4 {offsets = [0, 0], sizes = [1, 256], strides = [1, 1]} : vector<1x1280xf32> to vector<1x256xf32>
    %76 = vector.broadcast %55 : vector<16x1xf32> to vector<16x256xf32>
    %77 = vector.broadcast %75 : vector<1x256xf32> to vector<16x256xf32>
    %78 = arith.mulf %76, %77 : vector<16x256xf32>
    %79 = arith.addf %74, %78 : vector<16x256xf32>
    %80 = vector.extract_strided_slice %2 {offsets = [0, 1024], sizes = [1, 256], strides = [1, 1]} : vector<1x1280xf32> to vector<1x256xf32>
    %81 = vector.broadcast %80 : vector<1x256xf32> to vector<16x256xf32>
    %82 = arith.addf %79, %81 : vector<16x256xf32>
    %cst_17 = arith.constant dense<0xFF800000> : vector<16xf32>
    %83 = vector.multi_reduction <maximumf>, %82, %cst_17 [1] : vector<16x256xf32> to vector<16xf32>
    %84 = vector.shape_cast %83 : vector<16xf32> to vector<16x1xf32>
    %85 = vector.broadcast %84 : vector<16x1xf32> to vector<16x256xf32>
    %86 = arith.subf %82, %85 : vector<16x256xf32>
    %87 = math.exp %86 : vector<16x256xf32>
    %cst_18 = arith.constant dense<0.000000e+00> : vector<16xf32>
    %88 = vector.multi_reduction <add>, %87, %cst_18 [1] : vector<16x256xf32> to vector<16xf32>
    %89 = vector.shape_cast %88 : vector<16xf32> to vector<16x1xf32>
    %90 = math.log %89 : vector<16x1xf32>
    %91 = arith.mulf %86, %5 : vector<16x256xf32>
    %cst_19 = arith.constant dense<0.000000e+00> : vector<16xf32>
    %92 = vector.multi_reduction <add>, %91, %cst_19 [1] : vector<16x256xf32> to vector<16xf32>
    %93 = vector.shape_cast %92 : vector<16xf32> to vector<16x1xf32>
    %cst_20 = arith.constant 0.000000e+00 : f32
    %94 = vector.broadcast %cst_20 : f32 to vector<16x1xf32>
    %95 = arith.subf %94, %93 : vector<16x1xf32>
    %96 = arith.mulf %90, %9 : vector<16x1xf32>
    %97 = arith.addf %95, %96 : vector<16x1xf32>
    %98 = vector.extract_strided_slice %3 {offsets = [0, 256], sizes = [1, 64], strides = [1, 1]} : vector<1x1280xf32> to vector<1x64xf32>
    %99 = vector.broadcast %54 : vector<16x1xf32> to vector<16x64xf32>
    %100 = vector.broadcast %98 : vector<1x64xf32> to vector<16x64xf32>
    %101 = arith.mulf %99, %100 : vector<16x64xf32>
    %102 = arith.addf %19, %101 : vector<16x64xf32>
    %103 = vector.extract_strided_slice %4 {offsets = [0, 256], sizes = [1, 64], strides = [1, 1]} : vector<1x1280xf32> to vector<1x64xf32>
    %104 = vector.broadcast %55 : vector<16x1xf32> to vector<16x64xf32>
    %105 = vector.broadcast %103 : vector<1x64xf32> to vector<16x64xf32>
    %106 = arith.mulf %104, %105 : vector<16x64xf32>
    %107 = arith.addf %102, %106 : vector<16x64xf32>
    %cst_21 = arith.constant 0.000000e+00 : f32
    %108 = vector.broadcast %cst_21 : f32 to vector<16x64xf32>
    %109 = arith.cmpf oge, %107, %108 : vector<16x64xf32>
    %cst_22 = arith.constant 0.00999999977 : f32
    %110 = vector.broadcast %cst_22 : f32 to vector<16x64xf32>
    %111 = arith.mulf %110, %107 : vector<16x64xf32>
    %112 = arith.select %109, %107, %111 : vector<16x64xi1>, vector<16x64xf32>
    %113 = arith.truncf %112 : vector<16x64xf32> to vector<16x64xbf16>
    %c0_23 = arith.constant 0 : index
    %c384 = arith.constant 384 : index
    %114 = vector.load %arg2[%c0_23, %c384] : memref<128x1024xbf16, #tpu.memory_space<vmem>>, vector<64x128xbf16>
    %cst_24 = arith.constant dense<0.000000e+00> : vector<16x128xf32>
    %115 = tpu.matmul %113, %114, %cst_24 {dimension_numbers = #tpu.dot_dimension_numbers<[1], [0], [0], [1], [0, 0, 1, 1], [], []>} : vector<16x64xbf16>, vector<64x128xbf16>, vector<16x128xf32> -> vector<16x128xf32>
    %116 = vector.extract_strided_slice %2 {offsets = [0, 384], sizes = [1, 128], strides = [1, 1]} : vector<1x1280xf32> to vector<1x128xf32>
    %117 = vector.broadcast %116 : vector<1x128xf32> to vector<16x128xf32>
    %118 = arith.addf %115, %117 : vector<16x128xf32>
    %119 = vector.extract_strided_slice %118 {offsets = [0, 0], sizes = [16, 32], strides = [1, 1]} : vector<16x128xf32> to vector<16x32xf32>
    %120 = vector.extract_strided_slice %118 {offsets = [0, 32], sizes = [16, 32], strides = [1, 1]} : vector<16x128xf32> to vector<16x32xf32>
    %121 = vector.extract_strided_slice %118 {offsets = [0, 64], sizes = [16, 1], strides = [1, 1]} : vector<16x128xf32> to vector<16x1xf32>
    %122 = vector.extract_strided_slice %118 {offsets = [0, 65], sizes = [16, 1], strides = [1, 1]} : vector<16x128xf32> to vector<16x1xf32>
    %123 = math.exp %120 : vector<16x32xf32>
    %124 = arith.mulf %119, %119 : vector<16x32xf32>
    %cst_25 = arith.constant 1.000000e+00 : f32
    %125 = vector.broadcast %cst_25 : f32 to vector<16x32xf32>
    %126 = arith.subf %125, %124 : vector<16x32xf32>
    %cst_26 = arith.constant 2.000000e+00 : f32
    %127 = vector.broadcast %cst_26 : f32 to vector<16x32xf32>
    %128 = arith.mulf %127, %120 : vector<16x32xf32>
    %129 = arith.addf %126, %128 : vector<16x32xf32>
    %130 = arith.mulf %123, %123 : vector<16x32xf32>
    %131 = arith.subf %129, %130 : vector<16x32xf32>
    %cst_27 = arith.constant dense<0.000000e+00> : vector<16xf32>
    %132 = vector.multi_reduction <add>, %131, %cst_27 [1] : vector<16x32xf32> to vector<16xf32>
    %133 = vector.shape_cast %132 : vector<16xf32> to vector<16x1xf32>
    %cst_28 = arith.constant -5.000000e-01 : f32
    %134 = vector.broadcast %cst_28 : f32 to vector<16x1xf32>
    %135 = arith.mulf %134, %133 : vector<16x1xf32>
    %136 = arith.mulf %7, %123 : vector<16x32xf32>
    %137 = arith.addf %119, %136 : vector<16x32xf32>
    %138 = tpu.concatenate %70, %137 in 1 : vector<16x32xf32>, vector<16x32xf32> -> vector<16x64xf32>
    %139 = arith.truncf %138 : vector<16x64xf32> to vector<16x64xbf16>
    %c0_29 = arith.constant 0 : index
    %c512 = arith.constant 512 : index
    %140 = vector.load %arg2[%c0_29, %c512] : memref<128x1024xbf16, #tpu.memory_space<vmem>>, vector<64x512xbf16>
    %cst_30 = arith.constant dense<0.000000e+00> : vector<16x512xf32>
    %141 = tpu.matmul %139, %140, %cst_30 {dimension_numbers = #tpu.dot_dimension_numbers<[1], [0], [0], [1], [0, 0, 1, 1], [], []>} : vector<16x64xbf16>, vector<64x512xbf16>, vector<16x512xf32> -> vector<16x512xf32>
    %142 = vector.extract_strided_slice %2 {offsets = [0, 512], sizes = [1, 512], strides = [1, 1]} : vector<1x1280xf32> to vector<1x512xf32>
    %143 = vector.broadcast %142 : vector<1x512xf32> to vector<16x512xf32>
    %144 = arith.addf %141, %143 : vector<16x512xf32>
    %145 = vector.extract_strided_slice %144 {offsets = [0, 0], sizes = [16, 256], strides = [1, 1]} : vector<16x512xf32> to vector<16x256xf32>
    %cst_31 = arith.constant dense<0xFF800000> : vector<16xf32>
    %146 = vector.multi_reduction <maximumf>, %145, %cst_31 [1] : vector<16x256xf32> to vector<16xf32>
    %147 = vector.shape_cast %146 : vector<16xf32> to vector<16x1xf32>
    %148 = vector.broadcast %147 : vector<16x1xf32> to vector<16x256xf32>
    %149 = arith.subf %145, %148 : vector<16x256xf32>
    %150 = math.exp %149 : vector<16x256xf32>
    %cst_32 = arith.constant dense<0.000000e+00> : vector<16xf32>
    %151 = vector.multi_reduction <add>, %150, %cst_32 [1] : vector<16x256xf32> to vector<16xf32>
    %152 = vector.shape_cast %151 : vector<16xf32> to vector<16x1xf32>
    %153 = math.log %152 : vector<16x1xf32>
    %154 = arith.mulf %149, %5 : vector<16x256xf32>
    %cst_33 = arith.constant dense<0.000000e+00> : vector<16xf32>
    %155 = vector.multi_reduction <add>, %154, %cst_33 [1] : vector<16x256xf32> to vector<16xf32>
    %156 = vector.shape_cast %155 : vector<16xf32> to vector<16x1xf32>
    %cst_34 = arith.constant 0.000000e+00 : f32
    %157 = vector.broadcast %cst_34 : f32 to vector<16x1xf32>
    %158 = arith.subf %157, %156 : vector<16x1xf32>
    %159 = arith.mulf %153, %9 : vector<16x1xf32>
    %160 = arith.addf %158, %159 : vector<16x1xf32>
    %161 = vector.extract_strided_slice %144 {offsets = [0, 256], sizes = [16, 256], strides = [1, 1]} : vector<16x512xf32> to vector<16x256xf32>
    %cst_35 = arith.constant dense<0xFF800000> : vector<16xf32>
    %162 = vector.multi_reduction <maximumf>, %161, %cst_35 [1] : vector<16x256xf32> to vector<16xf32>
    %163 = vector.shape_cast %162 : vector<16xf32> to vector<16x1xf32>
    %164 = vector.broadcast %163 : vector<16x1xf32> to vector<16x256xf32>
    %165 = arith.subf %161, %164 : vector<16x256xf32>
    %166 = math.exp %165 : vector<16x256xf32>
    %cst_36 = arith.constant dense<0.000000e+00> : vector<16xf32>
    %167 = vector.multi_reduction <add>, %166, %cst_36 [1] : vector<16x256xf32> to vector<16xf32>
    %168 = vector.shape_cast %167 : vector<16xf32> to vector<16x1xf32>
    %169 = math.log %168 : vector<16x1xf32>
    %170 = arith.mulf %165, %5 : vector<16x256xf32>
    %cst_37 = arith.constant dense<0.000000e+00> : vector<16xf32>
    %171 = vector.multi_reduction <add>, %170, %cst_37 [1] : vector<16x256xf32> to vector<16xf32>
    %172 = vector.shape_cast %171 : vector<16xf32> to vector<16x1xf32>
    %cst_38 = arith.constant 0.000000e+00 : f32
    %173 = vector.broadcast %cst_38 : f32 to vector<16x1xf32>
    %174 = arith.subf %173, %172 : vector<16x1xf32>
    %175 = arith.mulf %169, %9 : vector<16x1xf32>
    %176 = arith.addf %174, %175 : vector<16x1xf32>
    %177 = vector.extract_strided_slice %3 {offsets = [0, 512], sizes = [1, 32], strides = [1, 1]} : vector<1x1280xf32> to vector<1x32xf32>
    %178 = vector.broadcast %177 : vector<1x32xf32> to vector<16x32xf32>
    %179 = arith.mulf %136, %178 : vector<16x32xf32>
    %cst_39 = arith.constant dense<0.000000e+00> : vector<16xf32>
    %180 = vector.multi_reduction <add>, %179, %cst_39 [1] : vector<16x32xf32> to vector<16xf32>
    %181 = vector.shape_cast %180 : vector<16xf32> to vector<16x1xf32>
    %182 = arith.addf %121, %181 : vector<16x1xf32>
    %183 = vector.extract_strided_slice %4 {offsets = [0, 512], sizes = [1, 32], strides = [1, 1]} : vector<1x1280xf32> to vector<1x32xf32>
    %184 = vector.broadcast %183 : vector<1x32xf32> to vector<16x32xf32>
    %185 = arith.mulf %136, %184 : vector<16x32xf32>
    %cst_40 = arith.constant dense<0.000000e+00> : vector<16xf32>
    %186 = vector.multi_reduction <add>, %185, %cst_40 [1] : vector<16x32xf32> to vector<16xf32>
    %187 = vector.shape_cast %186 : vector<16xf32> to vector<16x1xf32>
    %188 = arith.addf %122, %187 : vector<16x1xf32>
    %189 = arith.maximumf %182, %188 : vector<16x1xf32>
    %190 = arith.subf %182, %189 : vector<16x1xf32>
    %191 = math.exp %190 : vector<16x1xf32>
    %192 = arith.subf %188, %189 : vector<16x1xf32>
    %193 = math.exp %192 : vector<16x1xf32>
    %194 = arith.addf %191, %193 : vector<16x1xf32>
    %195 = math.log %194 : vector<16x1xf32>
    %196 = arith.addf %189, %195 : vector<16x1xf32>
    %197 = arith.subf %182, %196 : vector<16x1xf32>
    %198 = arith.mulf %197, %54 : vector<16x1xf32>
    %199 = arith.subf %188, %196 : vector<16x1xf32>
    %200 = arith.mulf %199, %55 : vector<16x1xf32>
    %201 = arith.addf %198, %200 : vector<16x1xf32>
    %cst_41 = arith.constant 0.000000e+00 : f32
    %202 = vector.broadcast %cst_41 : f32 to vector<16x1xf32>
    %203 = arith.subf %202, %201 : vector<16x1xf32>
    %204 = arith.addf %68, %160 : vector<16x1xf32>
    %205 = arith.addf %135, %176 : vector<16x1xf32>
    %206 = arith.addf %205, %203 : vector<16x1xf32>
    %cst_42 = arith.constant 0.000000e+00 : f32
    %207 = vector.broadcast %cst_42 : f32 to vector<16x119xf32>
    %208 = tpu.concatenate %206, %176, %135, %68, %97, %204, %203, %39, %45, %207 in 1 : vector<16x1xf32>, vector<16x1xf32>, vector<16x1xf32>, vector<16x1xf32>, vector<16x1xf32>, vector<16x1xf32>, vector<16x1xf32>, vector<16x1xf32>, vector<16x1xf32>, vector<16x119xf32> -> vector<16x128xf32>
    %c0_43 = arith.constant 0 : index
    %c0_44 = arith.constant 0 : index
    %209 = vector.load %arg4[%c0_43, %c0_44] : memref<16x128xf32, #tpu.memory_space<vmem>>, vector<16x128xf32>
    tpu.vector_store %arg4[%c0_43, %c0_44], %208 {strides = array<i32>} : memref<16x128xf32, #tpu.memory_space<vmem>>, vector<16x128xf32>,
    return
  }
  func.func @transform_0(%arg0: i32) -> (i32, i32) {
    %c0_i32 = arith.constant 0 : i32
    %c0_i32_0 = arith.constant 0 : i32
    %c0_i32_1 = arith.constant 0 : i32
    return %c0_i32, %c0_i32_0 : i32, i32
  }
  func.func @transform_1(%arg0: i32) -> (i32, i32) {
    %c0_i32 = arith.constant 0 : i32
    %c0_i32_0 = arith.constant 0 : i32
    %c0_i32_1 = arith.constant 0 : i32
    return %c0_i32, %c0_i32_0 : i32, i32
  }
  func.func @transform_2(%arg0: i32) -> (i32, i32) {
    %c0_i32 = arith.constant 0 : i32
    %c0_i32_0 = arith.constant 0 : i32
    %c0_i32_1 = arith.constant 0 : i32
    return %c0_i32, %c0_i32_0 : i32, i32
  }
  func.func @transform_3(%arg0: i32) -> (i32, i32) {
    %c0_i32 = arith.constant 0 : i32
    %c0_i32_0 = arith.constant 0 : i32
    %c0_i32_1 = arith.constant 0 : i32
    return %c0_i32, %c0_i32_0 : i32, i32
  }
}

</mosaic_0001>

<llo_original>
// kernel: sbdfc_forward.1
$region0: #{sbdfc_forward.1}
  #allocation0 [shape = 'u32[]', space=smem, size = 0x4, offset = 0x4, fixed_abs, tag = 'smem constant byte address 0x4 - core index']
  #allocation1 [shape = 'u32[144,128]{1,0:T(1,128)}', space=vmem, size = 0x12000, scoped, tag = 'internal scratch']
  %s0 = inlined_call_operand.vmem [shape: f32[16,768], index: 0, kind: input, shape index: {}]
  %s1 = inlined_call_operand.hbm [shape: bf16[128,1024], index: 1, kind: input, shape index: {}]
  %s2 = inlined_call_operand.vmem [shape: f32[8,1280], index: 2, kind: input, shape index: {}]
  %s3 = inlined_call_operand.vmem [shape: f32[16,128], index: 3, kind: output, shape index: {}]
  %s4 = sld [smem:[#allocation0]]
  $region26: #{sbdfc_forward.1} parent=0
    _
  %s6 = ssub.s32 1, %s4
  %s7 = scalar_select 0, %s6, %s4
  $region1: #{sbdfc_forward.1} parent=0
    #allocation2 [shape = 'u8[262144]{0}', space=vmem, size = 0x40000, scoped, tag = 'input window, operand 1, single buffered']
    #allocation3 [shape = 's32[1]{0}', space=sflag, size = 0x4, scoped, tag = 'scoped memory for sbdfc_forward.1']
    %8 = vsyncpa [#allocation3], 0
    // Predicated region
    $region2: #{sbdfc_forward.1} parent=1 // pred_check
      _
    $region3: #{sbdfc_forward.1} parent=1 // pred_check_branch
      %10 = sbr.rel (0) target = $region5
    $region4: #{sbdfc_forward.1} parent=1 // pred_region
      _
    $region5: #{sbdfc_forward.1} parent=1 // pred_fallthru
      _
    // Predicated region
    $region6: #{sbdfc_forward.1} parent=1 // pred_check
      _
    $region7: #{sbdfc_forward.1} parent=1 // pred_check_branch
      %12 = sbr.rel (0) target = $region9
    $region8: #{sbdfc_forward.1} parent=1 // pred_region
      %s14 = ssub.s32 8192, 8192
      %15 = vsyncadd [#allocation3], %s14
      %s16 = sshll.u32 [#allocation2], 4
      %s17 = int_to_ptr.vmem [resolvable:$true] %s16
      %22 = dma.hbm_to_vmem [thread:$0]  %s1, 8192, %s17, [#allocation3], 512, 512, 32
    $region9: #{sbdfc_forward.1} parent=1 // pred_fallthru
      _
    // Predicated region
    $region10: #{sbdfc_forward.1} parent=1 // pred_check
      _
    $region11: #{sbdfc_forward.1} parent=1 // pred_check_branch
      %24 = sbr.rel (0) target = $region13
    $region12: #{sbdfc_forward.1} parent=1 // pred_region
      _
    $region13: #{sbdfc_forward.1} parent=1 // pred_fallthru
      _
    // Predicated region
    $region14: #{sbdfc_forward.1} parent=1 // pred_check
      _
    $region15: #{sbdfc_forward.1} parent=1 // pred_check_branch
      %26 = sbr.rel (0) target = $region17
    $region16: #{sbdfc_forward.1} parent=1 // pred_region
      %27 = dma.done [#allocation3], 8192
    $region17: #{sbdfc_forward.1} parent=1 // pred_fallthru
      _
    %v29 = vld [vmem:[%s0] sm:$0xff]
    %v30 = vld [vmem:[%s0 + $0x8] sm:$0xff]
    %v31 = vld [vmem:[%s0 + $0x10] sm:$0xff]
    %v32 = vld [vmem:[%s0 + $0x18] sm:$0xff]
    %v33 = vld [vmem:[%s0 + $0x20] sm:$0xff]
    %v34 = vld [vmem:[%s0 + $0x28] sm:$0xff]
    %v35 = vld [vmem:[%s0 + $0x30] sm:$0xff]
    %v36 = vld [vmem:[%s0 + $0x38] sm:$0xff]
    %v37 = vld [vmem:[%s0 + $0x40] sm:$0xff]
    %v38 = vld [vmem:[%s0 + $0x48] sm:$0xff]
    %v39 = vld [vmem:[%s0 + $0x50] sm:$0xff]
    %v40 = vld [vmem:[%s0 + $0x58] sm:$0xff]
    %v41 = vld [vmem:[%s2] sm:$0xff]
    %v42 = vld [vmem:[%s2 + $0x8] sm:$0xff]
    %v43 = vld [vmem:[%s2 + $0x10] sm:$0xff]
    %v44 = vld [vmem:[%s2 + $0x18] sm:$0xff]
    %v45 = vld [vmem:[%s2 + $0x20] sm:$0xff]
    %v46 = vld [vmem:[%s2 + $0x28] sm:$0xff]
    %v47 = vld [vmem:[%s2 + $0x30] sm:$0xff]
    %v48 = vld [vmem:[%s2 + $0x38] sm:$0xff]
    %v49 = vld [vmem:[%s2 + $0x40] sm:$0xff]
    %v50 = vld [vmem:[%s2 + $0x48] sm:$0xff]
    %v51 = vadd.f32 %v31, %v32
    %52 = vadd.xlane.f32.xlu0 %v51
    %v53 = vpop.xlane.xlu0 %52
    %v54 = vadd.f32 %v37, %v38
    %55 = vadd.xlane.f32.xlu0 %v54
    %v56 = vpop.xlane.xlu0 %55
    %v57 = vpack.c.bf16 %v35, %v29
    %v58 = vld [vmem:[#allocation2] sm:$0xff]
    %v59 = vld [vmem:[#allocation2 + $0x20] sm:$0xff]
    %v60 = vld [vmem:[#allocation2 + $0x40] sm:$0xff]
    %v61 = vld [vmem:[#allocation2 + $0x60] sm:$0xff]
    %v62 = vld [vmem:[#allocation2 + $0x80] sm:$0xff]
    %v63 = vld [vmem:[#allocation2 + $0xa0] sm:$0xff]
    %v64 = vld [vmem:[#allocation2 + $0xc0] sm:$0xff]
    %v65 = vld [vmem:[#allocation2 + $0xe0] sm:$0xff]
    %v66 = vld [vmem:[#allocation2 + $0x100] sm:$0xff]
    %v67 = vld [vmem:[#allocation2 + $0x120] sm:$0xff]
    %v68 = vld [vmem:[#allocation2 + $0x140] sm:$0xff]
    %v69 = vld [vmem:[#allocation2 + $0x160] sm:$0xff]
    %v70 = vld [vmem:[#allocation2 + $0x180] sm:$0xff]
    %v71 = vld [vmem:[#allocation2 + $0x1a0] sm:$0xff]
    %v72 = vld [vmem:[#allocation2 + $0x1c0] sm:$0xff]
    %v73 = vld [vmem:[#allocation2 + $0x1e0] sm:$0xff]
    %v74 = vlaneseq
    %v75 = vshrl.u32 %v74, 7
    %v76 = vsub.s32 0, %v75
    %v77 = vrot.slane %v41, %v76
    %v78 = vlaneseq
    %v79 = vshrl.u32 %v78, 7
    %v80 = vsub.s32 0, %v79
    %v81 = vrot.slane %v42, %v80
    %v98 = vunpack.c.l.b16 %v58
    %v99 = vunpack.c.h.b16 %v58
    %v100 = vunpack.c.l.b16 %v59
    %v101 = vunpack.c.h.b16 %v59
    %v102 = vunpack.c.l.b16 %v60
    %v103 = vunpack.c.h.b16 %v60
    %v104 = vunpack.c.l.b16 %v61
    %v105 = vunpack.c.h.b16 %v61
    %v106 = vunpack.c.l.b16 %v62
    %v107 = vunpack.c.h.b16 %v62
    %v108 = vunpack.c.l.b16 %v63
    %v109 = vunpack.c.h.b16 %v63
    %v110 = vunpack.c.l.b16 %v64
    %v111 = vunpack.c.h.b16 %v64
    %v112 = vunpack.c.l.b16 %v65
    %v113 = vunpack.c.h.b16 %v65
    %v114 = vunpack.c.l.b16 %v66
    %v115 = vunpack.c.h.b16 %v66
    %v116 = vunpack.c.l.b16 %v67
    %v117 = vunpack.c.h.b16 %v67
    %v118 = vunpack.c.l.b16 %v68
    %v119 = vunpack.c.h.b16 %v68
    %v120 = vunpack.c.l.b16 %v69
    %v121 = vunpack.c.h.b16 %v69
    %v122 = vunpack.c.l.b16 %v70
    %v123 = vunpack.c.h.b16 %v70
    %v124 = vunpack.c.l.b16 %v71
    %v125 = vunpack.c.h.b16 %v71
    %v126 = vunpack.c.l.b16 %v72
    %v127 = vunpack.c.h.b16 %v72
    %v128 = vunpack.c.l.b16 %v73
    %v129 = vunpack.c.h.b16 %v73
    %v130 = vpack.c.b16 %v100, %v98
    %v131 = vpack.c.b16 %v101, %v99
    %v132 = vpack.c.b16 %v104, %v102
    %v133 = vpack.c.b16 %v105, %v103
    %v134 = vpack.c.b16 %v108, %v106
    %v135 = vpack.c.b16 %v109, %v107
    %v136 = vpack.c.b16 %v112, %v110
    %v137 = vpack.c.b16 %v113, %v111
    %v138 = vpack.c.b16 %v116, %v114
    %v139 = vpack.c.b16 %v117, %v115
    %v140 = vpack.c.b16 %v120, %v118
    %v141 = vpack.c.b16 %v121, %v119
    %v142 = vpack.c.b16 %v124, %v122
    %v143 = vpack.c.b16 %v125, %v123
    %v144 = vpack.c.b16 %v128, %v126
    %v145 = vpack.c.b16 %v129, %v127
    %162 = vmatprep.subr.bf16.mxu0 %v131
    %163 = vmatpush1.bf16.msra.mxu0 %v130
    %164 = vmatprep.subr.bf16.mxu0 %v133
    %165 = vmatpush1.bf16.msra.mxu0 %v132
    %166 = vmatprep.subr.bf16.mxu0 %v135
    %167 = vmatpush1.bf16.msra.mxu0 %v134
    %168 = vmatprep.subr.bf16.mxu0 %v137
    %169 = vmatpush1.bf16.msra.mxu0 %v136
    %170 = vmatprep.subr.bf16.mxu0 %v139
    %171 = vmatpush1.bf16.msra.mxu0 %v138
    %172 = vmatprep.subr.bf16.mxu0 %v141
    %173 = vmatpush1.bf16.msra.mxu0 %v140
    %174 = vmatprep.subr.bf16.mxu0 %v143
    %175 = vmatpush1.bf16.msra.mxu0 %v142
    %176 = vmatprep.subr.bf16.mxu0 %v145
    %177 = vmatpush1.bf16.msra.mxu0 %v144
    %178 = vmatprep.subr.bf16.mxu0 0
    %179 = vmatpush1.bf16.msra.mxu0 0
    %180 = vmatprep.subr.bf16.mxu0 0
    %181 = vmatpush1.bf16.msra.mxu0 0
    %182 = vmatprep.subr.bf16.mxu0 0
    %183 = vmatpush1.bf16.msra.mxu0 0
    %184 = vmatprep.subr.bf16.mxu0 0
    %185 = vmatpush1.bf16.msra.mxu0 0
    %186 = vmatprep.subr.bf16.mxu0 0
    %187 = vmatpush1.bf16.msra.mxu0 0
    %188 = vmatprep.subr.bf16.mxu0 0
    %189 = vmatpush1.bf16.msra.mxu0 0
    %190 = vmatprep.subr.bf16.mxu0 0
    %191 = vmatpush1.bf16.msra.mxu0 0
    %192 = vmatprep.subr.bf16.mxu0 0
    %193 = vmatpush1.bf16.msra.mxu0 0
    %194 = vmatprep.mubr.bf16.mxu0 0
    %195 = vmatmul.mubr.bf16.gmra.mrb[0].mxu0 %v57
    %v196 = vpop.f32.mrb[0].mxu0
    %v197 = vadd.f32 %v77, %v196
    %v198 = vpop.f32.mrb[0].mxu0
    %v199 = vadd.f32 %v81, %v198
    %v200 = vpop.f32.mrb[0].mxu0
    %v201 = vadd.f32 %v77, %v200
    %v202 = vpop.f32.mrb[0].mxu0
    %v203 = vadd.f32 %v81, %v202
    %204 = vdwg.mxu0
    %v205 = vpack.c.bf16 %v36, %v30
    %v206 = vld [vmem:[#allocation2 + $0x8] sm:$0xf]
    %v207 = vld [vmem:[#allocation2 + $0x28] sm:$0xf]
    %v208 = vld [vmem:[#allocation2 + $0x48] sm:$0xf]
    %v209 = vld [vmem:[#allocation2 + $0x68] sm:$0xf]
    %v210 = vld [vmem:[#allocation2 + $0x88] sm:$0xf]
    %v211 = vld [vmem:[#allocation2 + $0xa8] sm:$0xf]
    %v212 = vld [vmem:[#allocation2 + $0xc8] sm:$0xf]
    %v213 = vld [vmem:[#allocation2 + $0xe8] sm:$0xf]
    %v214 = vld [vmem:[#allocation2 + $0x108] sm:$0xf]
    %v215 = vld [vmem:[#allocation2 + $0x128] sm:$0xf]
    %v216 = vld [vmem:[#allocation2 + $0x148] sm:$0xf]
    %v217 = vld [vmem:[#allocation2 + $0x168] sm:$0xf]
    %v218 = vld [vmem:[#allocation2 + $0x188] sm:$0xf]
    %v219 = vld [vmem:[#allocation2 + $0x1a8] sm:$0xf]
    %v220 = vld [vmem:[#allocation2 + $0x1c8] sm:$0xf]
    %v221 = vld [vmem:[#allocation2 + $0x1e8] sm:$0xf]
    %v222 = vlaneseq
    %v223 = vshrl.u32 %v222, 7
    %v224 = vsub.s32 0, %v223
    %v225 = vrot.slane %v43, %v224
    %v242 = vunpack.c.l.b16 %v206
    %v243 = vunpack.c.l.b16 %v207
    %v244 = vunpack.c.l.b16 %v208
    %v245 = vunpack.c.l.b16 %v209
    %v246 = vunpack.c.l.b16 %v210
    %v247 = vunpack.c.l.b16 %v211
    %v248 = vunpack.c.l.b16 %v212
    %v249 = vunpack.c.l.b16 %v213
    %v250 = vunpack.c.l.b16 %v214
    %v251 = vunpack.c.l.b16 %v215
    %v252 = vunpack.c.l.b16 %v216
    %v253 = vunpack.c.l.b16 %v217
    %v254 = vunpack.c.l.b16 %v218
    %v255 = vunpack.c.l.b16 %v219
    %v256 = vunpack.c.l.b16 %v220
    %v257 = vunpack.c.l.b16 %v221
    %v258 = vpack.c.b16 %v243, %v242
    %v259 = vpack.c.b16 %v245, %v244
    %v260 = vpack.c.b16 %v247, %v246
    %v261 = vpack.c.b16 %v249, %v248
    %v262 = vpack.c.b16 %v251, %v250
    %v263 = vpack.c.b16 %v253, %v252
    %v264 = vpack.c.b16 %v255, %v254
    %v265 = vpack.c.b16 %v257, %v256
    %274 = vmatprep.subr.bf16.mxu0 0
    %275 = vmatpush1.bf16.msra.mxu0 %v258
    %276 = vmatprep.subr.bf16.mxu0 0
    %277 = vmatpush1.bf16.msra.mxu0 %v259
    %278 = vmatprep.subr.bf16.mxu0 0
    %279 = vmatpush1.bf16.msra.mxu0 %v260
    %280 = vmatprep.subr.bf16.mxu0 0
    %281 = vmatpush1.bf16.msra.mxu0 %v261
    %282 = vmatprep.subr.bf16.mxu0 0
    %283 = vmatpush1.bf16.msra.mxu0 %v262
    %284 = vmatprep.subr.bf16.mxu0 0
    %285 = vmatpush1.bf16.msra.mxu0 %v263
    %286 = vmatprep.subr.bf16.mxu0 0
    %287 = vmatpush1.bf16.msra.mxu0 %v264
    %288 = vmatprep.subr.bf16.mxu0 0
    %289 = vmatpush1.bf16.msra.mxu0 %v265
    %290 = vmatprep.subr.bf16.mxu0 0
    %291 = vmatpush1.bf16.msra.mxu0 0
    %292 = vmatprep.subr.bf16.mxu0 0
    %293 = vmatpush1.bf16.msra.mxu0 0
    %294 = vmatprep.subr.bf16.mxu0 0
    %295 = vmatpush1.bf16.msra.mxu0 0
    %296 = vmatprep.subr.bf16.mxu0 0
    %297 = vmatpush1.bf16.msra.mxu0 0
    %298 = vmatprep.subr.bf16.mxu0 0
    %299 = vmatpush1.bf16.msra.mxu0 0
    %300 = vmatprep.subr.bf16.mxu0 0
    %301 = vmatpush1.bf16.msra.mxu0 0
    %302 = vmatprep.subr.bf16.mxu0 0
    %303 = vmatpush1.bf16.msra.mxu0 0
    %304 = vmatprep.subr.bf16.mxu0 0
    %305 = vmatpush1.bf16.msra.mxu0 0
    %306 = vmatprep.mubr.bf16.mxu0 0
    %307 = vmatmul.mubr.bf16.gmra.mrb[0].mxu0 %v205
    %v308 = vpop.f32.mrb[0].mxu0
    %v309 = vadd.f32 %v225, %v308
    %v310 = vpop.f32.mrb[0].mxu0
    %v311 = vpop.f32.mrb[0].mxu0
    %v312 = vadd.f32 %v225, %v311
    %v313 = vpop.f32.mrb[0].mxu0
    %314 = vdwg.mxu0
    %vm315 = vcmp.ge.f32.partialorder %v309, 0.0
    %vm316 = vcmp.ge.f32.partialorder %v312, 0.0
    %v317 = vmul.f32 %v309, 0.01
    %v318 = vmul.f32 %v312, 0.01
    %v319 = vsel %vm315, %v309, %v317
    %v320 = vsel %vm316, %v312, %v318
    %v321 = vlaneseq
    %v322 = vshrl.u32 %v321, 7
    %v323 = vsub.s32 1, %v322
    %v324 = vrot.slane %v44, %v323
    %v325 = vmul.f32 %v319, %v324
    %v326 = vmul.f32 %v320, %v324
    %327 = vadd.xlane.f32.xlu0 %v325
    %v328 = vpop.xlane.xlu0 %327
    %329 = vadd.xlane.f32.xlu0 %v326
    %v330 = vpop.xlane.xlu0 %329
    %v331 = vadd.f32 %v199, %v328
    %v332 = vadd.f32 %v203, %v330
    %v333 = vlaneseq
    %v334 = vshrl.u32 %v333, 7
    %v335 = vsub.s32 2, %v334
    %v336 = vrot.slane %v44, %v335
    %v337 = vmul.f32 %v319, %v336
    %v338 = vmul.f32 %v320, %v336
    %339 = vadd.xlane.f32.xlu0 %v337
    %v340 = vpop.xlane.xlu0 %339
    %341 = vadd.xlane.f32.xlu0 %v338
    %v342 = vpop.xlane.xlu0 %341
    %v343 = vadd.f32 %v199, %v340
    %v344 = vadd.f32 %v203, %v342
    %347 = vrot.lane.b32.xlu0 %v343, 127
    %v348 = vpop.permute.xlu0 %347
    %349 = vrot.lane.b32.xlu0 %v344, 127
    %v350 = vpop.permute.xlu0 %349
    %v353 = vmax.f32 %v331, %v348
    %v354 = vmax.f32 %v332, %v350
    %v355 = vsub.f32 %v331, %v353
    %v356 = vsub.f32 %v332, %v354
    %v357 = vmul.f32 %v355, 1.442695
    %v358 = vpow.pop %v357
    %v359 = vmul.f32 %v356, 1.442695
    %v360 = vpow.pop %v359
    %363 = vrot.lane.b32.xlu0 %v353, 1
    %v364 = vpop.permute.xlu0 %363
    %365 = vrot.lane.b32.xlu0 %v354, 1
    %v366 = vpop.permute.xlu0 %365
    %v369 = vsub.f32 %v343, %v364
    %v370 = vsub.f32 %v344, %v366
    %v371 = vmul.f32 %v369, 1.442695
    %v372 = vpow.pop %v371
    %v373 = vmul.f32 %v370, 1.442695
    %v374 = vpow.pop %v373
    %377 = vrot.lane.b32.xlu0 %v372, 127
    %v378 = vpop.permute.xlu0 %377
    %379 = vrot.lane.b32.xlu0 %v374, 127
    %v380 = vpop.permute.xlu0 %379
    %v383 = vadd.f32 %v358, %v378
    %v384 = vadd.f32 %v360, %v380
    %v385 = vrcp.pop %v383
    %v386 = vmul.f32 1.0, %v385
    %v387 = vrcp.pop %v384
    %v388 = vmul.f32 1.0, %v387
    %v389 = vmul.f32 %v358, %v386
    %v390 = vmul.f32 %v360, %v388
    %393 = vrot.lane.b32.xlu0 %v386, 1
    %v394 = vpop.permute.xlu0 %393
    %395 = vrot.lane.b32.xlu0 %v388, 1
    %v396 = vpop.permute.xlu0 %395
    %v399 = vmul.f32 %v372, %v394
    %v400 = vmul.f32 %v374, %v396
    %v401 = vmul.f32 %v197, 1.442695
    %v402 = vpow.pop %v401
    %v403 = vmul.f32 %v201, 1.442695
    %v404 = vpow.pop %v403
    %v405 = vmul.f32 %v197, %v197
    %v406 = vmul.f32 %v201, %v201
    %v407 = vsub.f32 1.0, %v405
    %v408 = vsub.f32 1.0, %v406
    %v409 = vmul.f32 %v197, 2.0
    %v410 = vmul.f32 %v201, 2.0
    %413 = vrot.lane.b32.xlu0 %v409, 96
    %v414 = vpop.permute.xlu0 %413
    %415 = vrot.lane.b32.xlu0 %v410, 96
    %v416 = vpop.permute.xlu0 %415
    %v419 = vadd.f32 %v407, %v414
    %v420 = vadd.f32 %v408, %v416
    %v421 = vmul.f32 %v402, %v402
    %v422 = vmul.f32 %v404, %v404
    %425 = vrot.lane.b32.xlu0 %v421, 96
    %v426 = vpop.permute.xlu0 %425
    %427 = vrot.lane.b32.xlu0 %v422, 96
    %v428 = vpop.permute.xlu0 %427
    %v431 = vsub.f32 %v419, %v426
    %v432 = vsub.f32 %v420, %v428
    %vm433 = vcmask 261120
    %v434 = vsel %vm433, %v431, 0.0
    %435 = vadd.xlane.f32.xlu0 %v434
    %v436 = vpop.xlane.xlu0 %435
    %v437 = vsel %vm433, %v432, 0.0
    %438 = vadd.xlane.f32.xlu0 %v437
    %v439 = vpop.xlane.xlu0 %438
    %v440 = vmul.f32 %v436, -0.5
    %v441 = vmul.f32 %v439, -0.5
    %444 = vrot.lane.b32.xlu0 %v402, 96
    %v445 = vpop.permute.xlu0 %444
    %446 = vrot.lane.b32.xlu0 %v404, 96
    %v447 = vpop.permute.xlu0 %446
    %v450 = vmul.f32 %v33, %v445
    %v451 = vmul.f32 %v39, %v447
    %v452 = vadd.f32 %v450, %v197
    %v453 = vadd.f32 %v451, %v201
    %455 = vset.pattern.permute.xlu0 0
    %456 = vperm.xlu0 %455, %v389
    %v457 = vpop.permute.xlu0 %456
    %460 = vset.pattern.permute.xlu0 0
    %461 = vperm.xlu0 %460, %v390
    %v462 = vpop.permute.xlu0 %461
    %v464 = vlaneseq
    %v465 = vshrl.u32 %v464, 7
    %v466 = vsub.s32 1, %v465
    %v467 = vrot.slane %v41, %v466
    %v468 = vlaneseq
    %v469 = vshrl.u32 %v468, 7
    %v470 = vsub.s32 1, %v469
    %v471 = vrot.slane %v42, %v470
    %v472 = vmul.f32 %v457, %v467
    %v473 = vmul.f32 %v457, %v471
    %v474 = vmul.f32 %v462, %v467
    %v475 = vmul.f32 %v462, %v471
    %477 = vset.pattern.permute.xlu0 1
    %478 = vperm.xlu0 %477, %v399
    %v479 = vpop.permute.xlu0 %478
    %482 = vset.pattern.permute.xlu0 1
    %483 = vperm.xlu0 %482, %v400
    %v484 = vpop.permute.xlu0 %483
    %v486 = vlaneseq
    %v487 = vshrl.u32 %v486, 7
    %v488 = vsub.s32 2, %v487
    %v489 = vrot.slane %v41, %v488
    %v490 = vlaneseq
    %v491 = vshrl.u32 %v490, 7
    %v492 = vsub.s32 2, %v491
    %v493 = vrot.slane %v42, %v492
    %v494 = vmul.f32 %v479, %v489
    %v495 = vmul.f32 %v479, %v493
    %v496 = vmul.f32 %v484, %v489
    %v497 = vmul.f32 %v484, %v493
    %v498 = vadd.f32 %v472, %v494
    %v499 = vadd.f32 %v473, %v495
    %v500 = vadd.f32 %v474, %v496
    %v501 = vadd.f32 %v475, %v497
    %v502 = vlaneseq
    %v503 = vshrl.u32 %v502, 7
    %v504 = vsub.s32 0, %v503
    %v505 = vrot.slane %v49, %v504
    %v506 = vlaneseq
    %v507 = vshrl.u32 %v506, 7
    %v508 = vsub.s32 0, %v507
    %v509 = vrot.slane %v50, %v508
    %v510 = vadd.f32 %v498, %v505
    %v511 = vadd.f32 %v499, %v509
    %v512 = vadd.f32 %v500, %v505
    %v513 = vadd.f32 %v501, %v509
    %v514 = vmax.f32 %v510, %v511
    %515 = vmax.xlane.f32.xlu0 %v514
    %v516 = vpop.xlane.xlu0 %515
    %v517 = vmax.f32 %v512, %v513
    %518 = vmax.xlane.f32.xlu0 %v517
    %v519 = vpop.xlane.xlu0 %518
    %v520 = vsub.f32 %v510, %v516
    %v521 = vsub.f32 %v511, %v516
    %v522 = vsub.f32 %v512, %v519
    %v523 = vsub.f32 %v513, %v519
    %v524 = vmul.f32 %v520, 1.442695
    %v525 = vpow.pop %v524
    %v526 = vmul.f32 %v521, 1.442695
    %v527 = vpow.pop %v526
    %v528 = vmul.f32 %v522, 1.442695
    %v529 = vpow.pop %v528
    %v530 = vmul.f32 %v523, 1.442695
    %v531 = vpow.pop %v530
    %v532 = vadd.f32 %v525, %v527
    %533 = vadd.xlane.f32.xlu0 %v532
    %v534 = vpop.xlane.xlu0 %533
    %v535 = vadd.f32 %v529, %v531
    %536 = vadd.xlane.f32.xlu0 %v535
    %v537 = vpop.xlane.xlu0 %536
    %v538 = vlog2.pop %v534
    %v539 = vmul.f32 %v538, 0.6931472
    %v540 = vlog2.pop %v537
    %v541 = vmul.f32 %v540, 0.6931472
    %v542 = vmul.f32 %v520, %v31
    %v543 = vmul.f32 %v521, %v32
    %v544 = vmul.f32 %v522, %v37
    %v545 = vmul.f32 %v523, %v38
    %v546 = vadd.f32 %v542, %v543
    %547 = vadd.xlane.f32.xlu0 %v546
    %v548 = vpop.xlane.xlu0 %547
    %v549 = vadd.f32 %v544, %v545
    %550 = vadd.xlane.f32.xlu0 %v549
    %v551 = vpop.xlane.xlu0 %550
    %v552 = vsub.f32 0.0, %v548
    %v553 = vsub.f32 0.0, %v551
    %v554 = vmul.f32 %v539, %v53
    %v555 = vmul.f32 %v541, %v56
    %v556 = vadd.f32 %v552, %v554
    %v557 = vadd.f32 %v553, %v555
    %v558 = vlaneseq
    %v559 = vshrl.u32 %v558, 7
    %v560 = vsub.s32 1, %v559
    %v561 = vrot.slane %v43, %v560
    %v562 = vmul.f32 %v457, %v561
    %v563 = vmul.f32 %v462, %v561
    %566 = vrot.lane.b32.xlu0 %v562, 64
    %v567 = vpop.permute.xlu0 %566
    %568 = vrot.lane.b32.xlu0 %v563, 64
    %v569 = vpop.permute.xlu0 %568
    %v572 = vadd.f32 %v197, %v567
    %v573 = vadd.f32 %v201, %v569
    %v574 = vlaneseq
    %v575 = vshrl.u32 %v574, 7
    %v576 = vsub.s32 2, %v575
    %v577 = vrot.slane %v43, %v576
    %v578 = vmul.f32 %v479, %v577
    %v579 = vmul.f32 %v484, %v577
    %582 = vrot.lane.b32.xlu0 %v578, 64
    %v583 = vpop.permute.xlu0 %582
    %584 = vrot.lane.b32.xlu0 %v579, 64
    %v585 = vpop.permute.xlu0 %584
    %v588 = vadd.f32 %v572, %v583
    %v589 = vadd.f32 %v573, %v585
    %vm590 = vcmp.ge.f32.partialorder %v588, 0.0
    %vm591 = vcmp.ge.f32.partialorder %v589, 0.0
    %v592 = vmul.f32 %v588, 0.01
    %v593 = vmul.f32 %v589, 0.01
    %v594 = vsel %vm590, %v588, %v592
    %v595 = vsel %vm591, %v589, %v593
    %v596 = vpack.c.bf16 %v595, %v594
    %v597 = vld [vmem:[#allocation2 + $0xc] sm:$0xf]
    %v598 = vld [vmem:[#allocation2 + $0x2c] sm:$0xf]
    %v599 = vld [vmem:[#allocation2 + $0x4c] sm:$0xf]
    %v600 = vld [vmem:[#allocation2 + $0x6c] sm:$0xf]
    %v601 = vld [vmem:[#allocation2 + $0x8c] sm:$0xf]
    %v602 = vld [vmem:[#allocation2 + $0xac] sm:$0xf]
    %v603 = vld [vmem:[#allocation2 + $0xcc] sm:$0xf]
    %v604 = vld [vmem:[#allocation2 + $0xec] sm:$0xf]
    %v605 = vlaneseq
    %v606 = vshrl.u32 %v605, 7
    %v607 = vsub.s32 0, %v606
    %v608 = vrot.slane %v44, %v607
    %610 = vrot.lane.b32.xlu0 %v596, 64
    %v611 = vpop.permute.xlu0 %610
    %v620 = vunpack.c.l.b16 %v597
    %v621 = vunpack.c.l.b16 %v598
    %v622 = vunpack.c.l.b16 %v599
    %v623 = vunpack.c.l.b16 %v600
    %v624 = vunpack.c.l.b16 %v601
    %v625 = vunpack.c.l.b16 %v602
    %v626 = vunpack.c.l.b16 %v603
    %v627 = vunpack.c.l.b16 %v604
    %v628 = vpack.c.b16 %v621, %v620
    %v629 = vpack.c.b16 %v623, %v622
    %v630 = vpack.c.b16 %v625, %v624
    %v631 = vpack.c.b16 %v627, %v626
    %vm636 = vcmask 523264
    %v638 = vsel %vm636, %v611, 0
    %640 = vmatprep.subr.bf16.mxu0 0
    %641 = vmatpush1.bf16.msra.mxu0 %v628
    %642 = vmatprep.subr.bf16.mxu0 0
    %643 = vmatpush1.bf16.msra.mxu0 %v629
    %644 = vmatprep.subr.bf16.mxu0 0
    %645 = vmatpush1.bf16.msra.mxu0 %v630
    %646 = vmatprep.subr.bf16.mxu0 0
    %647 = vmatpush1.bf16.msra.mxu0 %v631
    %648 = vmatprep.subr.bf16.mxu0 0
    %649 = vmatpush1.bf16.msra.mxu0 0
    %650 = vmatprep.subr.bf16.mxu0 0
    %651 = vmatpush1.bf16.msra.mxu0 0
    %652 = vmatprep.subr.bf16.mxu0 0
    %653 = vmatpush1.bf16.msra.mxu0 0
    %654 = vmatprep.subr.bf16.mxu0 0
    %655 = vmatpush1.bf16.msra.mxu0 0
    %656 = vmatprep.subr.bf16.mxu0 0
    %657 = vmatpush1.bf16.msra.mxu0 0
    %658 = vmatprep.subr.bf16.mxu0 0
    %659 = vmatpush1.bf16.msra.mxu0 0
    %660 = vmatprep.subr.bf16.mxu0 0
    %661 = vmatpush1.bf16.msra.mxu0 0
    %662 = vmatprep.subr.bf16.mxu0 0
    %663 = vmatpush1.bf16.msra.mxu0 0
    %664 = vmatprep.subr.bf16.mxu0 0
    %665 = vmatpush1.bf16.msra.mxu0 0
    %666 = vmatprep.subr.bf16.mxu0 0
    %667 = vmatpush1.bf16.msra.mxu0 0
    %668 = vmatprep.subr.bf16.mxu0 0
    %669 = vmatpush1.bf16.msra.mxu0 0
    %670 = vmatprep.subr.bf16.mxu0 0
    %671 = vmatpush1.bf16.msra.mxu0 0
    %672 = vmatprep.mubr.bf16.mxu0 0
    %673 = vmatmul.mubr.bf16.gmra.mrb[0].mxu0 %v638
    %v674 = vpop.f32.mrb[0].mxu0
    %v675 = vadd.f32 %v608, %v674
    %v676 = vpop.f32.mrb[0].mxu0
    %v677 = vpop.f32.mrb[0].mxu0
    %v678 = vadd.f32 %v608, %v677
    %v679 = vpop.f32.mrb[0].mxu0
    %680 = vdwg.mxu0
    %v681 = vmul.f32 %v675, 1.442695
    %v682 = vpow.pop %v681
    %v683 = vmul.f32 %v678, 1.442695
    %v684 = vpow.pop %v683
    %v685 = vmul.f32 %v675, %v675
    %v686 = vmul.f32 %v678, %v678
    %v687 = vsub.f32 1.0, %v685
    %v688 = vsub.f32 1.0, %v686
    %v689 = vmul.f32 %v675, 2.0
    %v690 = vmul.f32 %v678, 2.0
    %693 = vrot.lane.b32.xlu0 %v689, 96
    %v694 = vpop.permute.xlu0 %693
    %695 = vrot.lane.b32.xlu0 %v690, 96
    %v696 = vpop.permute.xlu0 %695
    %v699 = vadd.f32 %v687, %v694
    %v700 = vadd.f32 %v688, %v696
    %v701 = vmul.f32 %v682, %v682
    %v702 = vmul.f32 %v684, %v684
    %705 = vrot.lane.b32.xlu0 %v701, 96
    %v706 = vpop.permute.xlu0 %705
    %707 = vrot.lane.b32.xlu0 %v702, 96
    %v708 = vpop.permute.xlu0 %707
    %v711 = vsub.f32 %v699, %v706
    %v712 = vsub.f32 %v700, %v708
    %v713 = vsel %vm433, %v711, 0.0
    %714 = vadd.xlane.f32.xlu0 %v713
    %v715 = vpop.xlane.xlu0 %714
    %v716 = vsel %vm433, %v712, 0.0
    %717 = vadd.xlane.f32.xlu0 %v716
    %v718 = vpop.xlane.xlu0 %717
    %v719 = vmul.f32 %v715, -0.5
    %v720 = vmul.f32 %v718, -0.5
    %723 = vrot.lane.b32.xlu0 %v682, 96
    %v724 = vpop.permute.xlu0 %723
    %725 = vrot.lane.b32.xlu0 %v684, 96
    %v726 = vpop.permute.xlu0 %725
    %v729 = vmul.f32 %v34, %v724
    %v730 = vmul.f32 %v40, %v726
    %v731 = vadd.f32 %v675, %v729
    %v732 = vadd.f32 %v678, %v730
    %735 = vrot.lane.b32.xlu0 %v731, 32
    %v736 = vpop.permute.xlu0 %735
    %737 = vrot.lane.b32.xlu0 %v732, 32
    %v738 = vpop.permute.xlu0 %737
    %v741 = vsel %vm433, %v452, %v736
    %v742 = vsel %vm433, %v453, %v738
    %v743 = vpack.c.bf16 %v742, %v741
    %v744 = vld [vmem:[#allocation2 + $0x10] sm:$0xff]
    %v745 = vld [vmem:[#allocation2 + $0x18] sm:$0xff]
    %v746 = vld [vmem:[#allocation2 + $0x30] sm:$0xff]
    %v747 = vld [vmem:[#allocation2 + $0x38] sm:$0xff]
    %v748 = vld [vmem:[#allocation2 + $0x50] sm:$0xff]
    %v749 = vld [vmem:[#allocation2 + $0x58] sm:$0xff]
    %v750 = vld [vmem:[#allocation2 + $0x70] sm:$0xff]
    %v751 = vld [vmem:[#allocation2 + $0x78] sm:$0xff]
    %v752 = vld [vmem:[#allocation2 + $0x90] sm:$0xff]
    %v753 = vld [vmem:[#allocation2 + $0x98] sm:$0xff]
    %v754 = vld [vmem:[#allocation2 + $0xb0] sm:$0xff]
    %v755 = vld [vmem:[#allocation2 + $0xb8] sm:$0xff]
    %v756 = vld [vmem:[#allocation2 + $0xd0] sm:$0xff]
    %v757 = vld [vmem:[#allocation2 + $0xd8] sm:$0xff]
    %v758 = vld [vmem:[#allocation2 + $0xf0] sm:$0xff]
    %v759 = vld [vmem:[#allocation2 + $0xf8] sm:$0xff]
    %v760 = vlaneseq
    %v761 = vshrl.u32 %v760, 7
    %v762 = vsub.s32 0, %v761
    %v763 = vrot.slane %v45, %v762
    %v764 = vlaneseq
    %v765 = vshrl.u32 %v764, 7
    %v766 = vsub.s32 0, %v765
    %v767 = vrot.slane %v46, %v766
    %v768 = vlaneseq
    %v769 = vshrl.u32 %v768, 7
    %v770 = vsub.s32 0, %v769
    %v771 = vrot.slane %v47, %v770
    %v772 = vlaneseq
    %v773 = vshrl.u32 %v772, 7
    %v774 = vsub.s32 0, %v773
    %v775 = vrot.slane %v48, %v774
    %v792 = vunpack.c.l.b16 %v744
    %v793 = vunpack.c.h.b16 %v744
    %v794 = vunpack.c.l.b16 %v745
    %v795 = vunpack.c.h.b16 %v745
    %v796 = vunpack.c.l.b16 %v746
    %v797 = vunpack.c.h.b16 %v746
    %v798 = vunpack.c.l.b16 %v747
    %v799 = vunpack.c.h.b16 %v747
    %v800 = vunpack.c.l.b16 %v748
    %v801 = vunpack.c.h.b16 %v748
    %v802 = vunpack.c.l.b16 %v749
    %v803 = vunpack.c.h.b16 %v749
    %v804 = vunpack.c.l.b16 %v750
    %v805 = vunpack.c.h.b16 %v750
    %v806 = vunpack.c.l.b16 %v751
    %v807 = vunpack.c.h.b16 %v751
    %v808 = vunpack.c.l.b16 %v752
    %v809 = vunpack.c.h.b16 %v752
    %v810 = vunpack.c.l.b16 %v753
    %v811 = vunpack.c.h.b16 %v753
    %v812 = vunpack.c.l.b16 %v754
    %v813 = vunpack.c.h.b16 %v754
    %v814 = vunpack.c.l.b16 %v755
    %v815 = vunpack.c.h.b16 %v755
    %v816 = vunpack.c.l.b16 %v756
    %v817 = vunpack.c.h.b16 %v756
    %v818 = vunpack.c.l.b16 %v757
    %v819 = vunpack.c.h.b16 %v757
    %v820 = vunpack.c.l.b16 %v758
    %v821 = vunpack.c.h.b16 %v758
    %v822 = vunpack.c.l.b16 %v759
    %v823 = vunpack.c.h.b16 %v759
    %v824 = vpack.c.b16 %v796, %v792
    %v825 = vpack.c.b16 %v797, %v793
    %v826 = vpack.c.b16 %v798, %v794
    %v827 = vpack.c.b16 %v799, %v795
    %v828 = vpack.c.b16 %v804, %v800
    %v829 = vpack.c.b16 %v805, %v801
    %v830 = vpack.c.b16 %v806, %v802
    %v831 = vpack.c.b16 %v807, %v803
    %v832 = vpack.c.b16 %v812, %v808
    %v833 = vpack.c.b16 %v813, %v809
    %v834 = vpack.c.b16 %v814, %v810
    %v835 = vpack.c.b16 %v815, %v811
    %v836 = vpack.c.b16 %v820, %v816
    %v837 = vpack.c.b16 %v821, %v817
    %v838 = vpack.c.b16 %v822, %v818
    %v839 = vpack.c.b16 %v823, %v819
    %v857 = vsel %vm636, %v743, 0
    %859 = vmatprep.subr.bf16.mxu0 %v825
    %860 = vmatpush1.bf16.msra.mxu0 %v824
    %861 = vmatprep.subr.bf16.mxu0 %v829
    %862 = vmatpush1.bf16.msra.mxu0 %v828
    %863 = vmatprep.subr.bf16.mxu0 %v833
    %864 = vmatpush1.bf16.msra.mxu0 %v832
    %865 = vmatprep.subr.bf16.mxu0 %v837
    %866 = vmatpush1.bf16.msra.mxu0 %v836
    %867 = vmatprep.subr.bf16.mxu0 0
    %868 = vmatpush1.bf16.msra.mxu0 0
    %869 = vmatprep.subr.bf16.mxu0 0
    %870 = vmatpush1.bf16.msra.mxu0 0
    %871 = vmatprep.subr.bf16.mxu0 0
    %872 = vmatpush1.bf16.msra.mxu0 0
    %873 = vmatprep.subr.bf16.mxu0 0
    %874 = vmatpush1.bf16.msra.mxu0 0
    %875 = vmatprep.subr.bf16.mxu0 0
    %876 = vmatpush1.bf16.msra.mxu0 0
    %877 = vmatprep.subr.bf16.mxu0 0
    %878 = vmatpush1.bf16.msra.mxu0 0
    %879 = vmatprep.subr.bf16.mxu0 0
    %880 = vmatpush1.bf16.msra.mxu0 0
    %881 = vmatprep.subr.bf16.mxu0 0
    %882 = vmatpush1.bf16.msra.mxu0 0
    %883 = vmatprep.subr.bf16.mxu0 0
    %884 = vmatpush1.bf16.msra.mxu0 0
    %885 = vmatprep.subr.bf16.mxu0 0
    %886 = vmatpush1.bf16.msra.mxu0 0
    %887 = vmatprep.subr.bf16.mxu0 0
    %888 = vmatpush1.bf16.msra.mxu0 0
    %889 = vmatprep.subr.bf16.mxu0 0
    %890 = vmatpush1.bf16.msra.mxu0 0
    %891 = vmatprep.mubr.bf16.mxu0 0
    %892 = vmatmul.mubr.bf16.gmra.mrb[0].mxu0 %v857
    %v893 = vpop.f32.mrb[0].mxu0
    %v894 = vadd.f32 %v763, %v893
    %v895 = vpop.f32.mrb[0].mxu0
    %v896 = vadd.f32 %v767, %v895
    %v897 = vpop.f32.mrb[0].mxu0
    %v898 = vadd.f32 %v763, %v897
    %v899 = vpop.f32.mrb[0].mxu0
    %v900 = vadd.f32 %v767, %v899
    %901 = vdwg.mxu0
    %902 = vmatprep.subr.bf16.mxu0 %v827
    %903 = vmatpush1.bf16.msra.mxu0 %v826
    %904 = vmatprep.subr.bf16.mxu0 %v831
    %905 = vmatpush1.bf16.msra.mxu0 %v830
    %906 = vmatprep.subr.bf16.mxu0 %v835
    %907 = vmatpush1.bf16.msra.mxu0 %v834
    %908 = vmatprep.subr.bf16.mxu0 %v839
    %909 = vmatpush1.bf16.msra.mxu0 %v838
    %910 = vmatprep.subr.bf16.mxu0 0
    %911 = vmatpush1.bf16.msra.mxu0 0
    %912 = vmatprep.subr.bf16.mxu0 0
    %913 = vmatpush1.bf16.msra.mxu0 0
    %914 = vmatprep.subr.bf16.mxu0 0
    %915 = vmatpush1.bf16.msra.mxu0 0
    %916 = vmatprep.subr.bf16.mxu0 0
    %917 = vmatpush1.bf16.msra.mxu0 0
    %918 = vmatprep.subr.bf16.mxu0 0
    %919 = vmatpush1.bf16.msra.mxu0 0
    %920 = vmatprep.subr.bf16.mxu0 0
    %921 = vmatpush1.bf16.msra.mxu0 0
    %922 = vmatprep.subr.bf16.mxu0 0
    %923 = vmatpush1.bf16.msra.mxu0 0
    %924 = vmatprep.subr.bf16.mxu0 0
    %925 = vmatpush1.bf16.msra.mxu0 0
    %926 = vmatprep.subr.bf16.mxu0 0
    %927 = vmatpush1.bf16.msra.mxu0 0
    %928 = vmatprep.subr.bf16.mxu0 0
    %929 = vmatpush1.bf16.msra.mxu0 0
    %930 = vmatprep.subr.bf16.mxu0 0
    %931 = vmatpush1.bf16.msra.mxu0 0
    %932 = vmatprep.subr.bf16.mxu0 0
    %933 = vmatpush1.bf16.msra.mxu0 0
    %934 = vmatprep.mubr.bf16.mxu0 0
    %935 = vmatmul.mubr.bf16.gmra.mrb[0].mxu0 %v857
    %v936 = vpop.f32.mrb[0].mxu0
    %v937 = vadd.f32 %v771, %v936
    %v938 = vpop.f32.mrb[0].mxu0
    %v939 = vadd.f32 %v775, %v938
    %v940 = vpop.f32.mrb[0].mxu0
    %v941 = vadd.f32 %v771, %v940
    %v942 = vpop.f32.mrb[0].mxu0
    %v943 = vadd.f32 %v775, %v942
    %944 = vdwg.mxu0
    %v945 = vmax.f32 %v894, %v896
    %946 = vmax.xlane.f32.xlu0 %v945
    %v947 = vpop.xlane.xlu0 %946
    %v948 = vmax.f32 %v898, %v900
    %949 = vmax.xlane.f32.xlu0 %v948
    %v950 = vpop.xlane.xlu0 %949
    %v951 = vsub.f32 %v894, %v947
    %v952 = vsub.f32 %v896, %v947
    %v953 = vsub.f32 %v898, %v950
    %v954 = vsub.f32 %v900, %v950
    %v955 = vmul.f32 %v951, 1.442695
    %v956 = vpow.pop %v955
    %v957 = vmul.f32 %v952, 1.442695
    %v958 = vpow.pop %v957
    %v959 = vmul.f32 %v953, 1.442695
    %v960 = vpow.pop %v959
    %v961 = vmul.f32 %v954, 1.442695
    %v962 = vpow.pop %v961
    %v963 = vadd.f32 %v956, %v958
    %964 = vadd.xlane.f32.xlu0 %v963
    %v965 = vpop.xlane.xlu0 %964
    %v966 = vadd.f32 %v960, %v962
    %967 = vadd.xlane.f32.xlu0 %v966
    %v968 = vpop.xlane.xlu0 %967
    %v969 = vlog2.pop %v965
    %v970 = vmul.f32 %v969, 0.6931472
    %v971 = vlog2.pop %v968
    %v972 = vmul.f32 %v971, 0.6931472
    %v973 = vmul.f32 %v951, %v31
    %v974 = vmul.f32 %v952, %v32
    %v975 = vmul.f32 %v953, %v37
    %v976 = vmul.f32 %v954, %v38
    %v977 = vadd.f32 %v973, %v974
    %978 = vadd.xlane.f32.xlu0 %v977
    %v979 = vpop.xlane.xlu0 %978
    %v980 = vadd.f32 %v975, %v976
    %981 = vadd.xlane.f32.xlu0 %v980
    %v982 = vpop.xlane.xlu0 %981
    %v983 = vsub.f32 0.0, %v979
    %v984 = vsub.f32 0.0, %v982
    %v985 = vmul.f32 %v970, %v53
    %v986 = vmul.f32 %v972, %v56
    %v987 = vadd.f32 %v983, %v985
    %v988 = vadd.f32 %v984, %v986
    %v989 = vmax.f32 %v937, %v939
    %990 = vmax.xlane.f32.xlu0 %v989
    %v991 = vpop.xlane.xlu0 %990
    %v992 = vmax.f32 %v941, %v943
    %993 = vmax.xlane.f32.xlu0 %v992
    %v994 = vpop.xlane.xlu0 %993
    %v995 = vsub.f32 %v937, %v991
    %v996 = vsub.f32 %v939, %v991
    %v997 = vsub.f32 %v941, %v994
    %v998 = vsub.f32 %v943, %v994
    %v999 = vmul.f32 %v995, 1.442695
    %v1000 = vpow.pop %v999
    %v1001 = vmul.f32 %v996, 1.442695
    %v1002 = vpow.pop %v1001
    %v1003 = vmul.f32 %v997, 1.442695
    %v1004 = vpow.pop %v1003
    %v1005 = vmul.f32 %v998, 1.442695
    %v1006 = vpow.pop %v1005
    %v1007 = vadd.f32 %v1000, %v1002
    %1008 = vadd.xlane.f32.xlu0 %v1007
    %v1009 = vpop.xlane.xlu0 %1008
    %v1010 = vadd.f32 %v1004, %v1006
    %1011 = vadd.xlane.f32.xlu0 %v1010
    %v1012 = vpop.xlane.xlu0 %1011
    %v1013 = vlog2.pop %v1009
    %v1014 = vmul.f32 %v1013, 0.6931472
    %v1015 = vlog2.pop %v1012
    %v1016 = vmul.f32 %v1015, 0.6931472
    %v1017 = vmul.f32 %v995, %v31
    %v1018 = vmul.f32 %v996, %v32
    %v1019 = vmul.f32 %v997, %v37
    %v1020 = vmul.f32 %v998, %v38
    %v1021 = vadd.f32 %v1017, %v1018
    %1022 = vadd.xlane.f32.xlu0 %v1021
    %v1023 = vpop.xlane.xlu0 %1022
    %v1024 = vadd.f32 %v1019, %v1020
    %1025 = vadd.xlane.f32.xlu0 %v1024
    %v1026 = vpop.xlane.xlu0 %1025
    %v1027 = vsub.f32 0.0, %v1023
    %v1028 = vsub.f32 0.0, %v1026
    %v1029 = vmul.f32 %v1014, %v53
    %v1030 = vmul.f32 %v1016, %v56
    %v1031 = vadd.f32 %v1027, %v1029
    %v1032 = vadd.f32 %v1028, %v1030
    %v1033 = vlaneseq
    %v1034 = vshrl.u32 %v1033, 7
    %v1035 = vsub.s32 1, %v1034
    %v1036 = vrot.slane %v45, %v1035
    %v1037 = vmul.f32 %v729, %v1036
    %v1038 = vmul.f32 %v730, %v1036
    %v1039 = vsel %vm433, %v1037, 0.0
    %1040 = vadd.xlane.f32.xlu0 %v1039
    %v1041 = vpop.xlane.xlu0 %1040
    %v1042 = vsel %vm433, %v1038, 0.0
    %1043 = vadd.xlane.f32.xlu0 %v1042
    %v1044 = vpop.xlane.xlu0 %1043
    %v1045 = vadd.f32 %v675, %v1041
    %v1046 = vadd.f32 %v678, %v1044
    %v1047 = vlaneseq
    %v1048 = vshrl.u32 %v1047, 7
    %v1049 = vsub.s32 2, %v1048
    %v1050 = vrot.slane %v45, %v1049
    %v1051 = vmul.f32 %v729, %v1050
    %v1052 = vmul.f32 %v730, %v1050
    %v1053 = vsel %vm433, %v1051, 0.0
    %1054 = vadd.xlane.f32.xlu0 %v1053
    %v1055 = vpop.xlane.xlu0 %1054
    %v1056 = vsel %vm433, %v1052, 0.0
    %1057 = vadd.xlane.f32.xlu0 %v1056
    %v1058 = vpop.xlane.xlu0 %1057
    %v1059 = vadd.f32 %v675, %v1055
    %v1060 = vadd.f32 %v678, %v1058
    %1063 = vrot.lane.b32.xlu0 %v1059, 127
    %v1064 = vpop.permute.xlu0 %1063
    %1065 = vrot.lane.b32.xlu0 %v1060, 127
    %v1066 = vpop.permute.xlu0 %1065
    %v1069 = vmax.f32 %v1045, %v1064
    %v1070 = vmax.f32 %v1046, %v1066
    %v1071 = vsub.f32 %v1045, %v1069
    %v1072 = vsub.f32 %v1046, %v1070
    %v1073 = vmul.f32 %v1071, 1.442695
    %v1074 = vpow.pop %v1073
    %v1075 = vmul.f32 %v1072, 1.442695
    %v1076 = vpow.pop %v1075
    %1079 = vrot.lane.b32.xlu0 %v1069, 1
    %v1080 = vpop.permute.xlu0 %1079
    %1081 = vrot.lane.b32.xlu0 %v1070, 1
    %v1082 = vpop.permute.xlu0 %1081
    %v1085 = vsub.f32 %v1059, %v1080
    %v1086 = vsub.f32 %v1060, %v1082
    %v1087 = vmul.f32 %v1085, 1.442695
    %v1088 = vpow.pop %v1087
    %v1089 = vmul.f32 %v1086, 1.442695
    %v1090 = vpow.pop %v1089
    %1093 = vrot.lane.b32.xlu0 %v1088, 127
    %v1094 = vpop.permute.xlu0 %1093
    %1095 = vrot.lane.b32.xlu0 %v1090, 127
    %v1096 = vpop.permute.xlu0 %1095
    %v1099 = vadd.f32 %v1074, %v1094
    %v1100 = vadd.f32 %v1076, %v1096
    %v1101 = vlog2.pop %v1099
    %v1102 = vmul.f32 %v1101, 0.6931472
    %v1103 = vlog2.pop %v1100
    %v1104 = vmul.f32 %v1103, 0.6931472
    %v1105 = vadd.f32 %v1069, %v1102
    %v1106 = vadd.f32 %v1070, %v1104
    %v1107 = vsub.f32 %v1045, %v1105
    %v1108 = vsub.f32 %v1046, %v1106
    %1109 = vrot.lane.b32.xlu0 %v389, 64
    %v1110 = vpop.permute.xlu0 %1109
    %1111 = vrot.lane.b32.xlu0 %v390, 64
    %v1112 = vpop.permute.xlu0 %1111
    %v1115 = vmul.f32 %v1107, %v1110
    %v1116 = vmul.f32 %v1108, %v1112
    %1119 = vrot.lane.b32.xlu0 %v1105, 1
    %v1120 = vpop.permute.xlu0 %1119
    %1121 = vrot.lane.b32.xlu0 %v1106, 1
    %v1122 = vpop.permute.xlu0 %1121
    %v1125 = vsub.f32 %v1059, %v1120
    %v1126 = vsub.f32 %v1060, %v1122
    %1127 = vrot.lane.b32.xlu0 %v399, 64
    %v1128 = vpop.permute.xlu0 %1127
    %1129 = vrot.lane.b32.xlu0 %v400, 64
    %v1130 = vpop.permute.xlu0 %1129
    %v1133 = vmul.f32 %v1125, %v1128
    %v1134 = vmul.f32 %v1126, %v1130
    %1137 = vrot.lane.b32.xlu0 %v1133, 127
    %v1138 = vpop.permute.xlu0 %1137
    %1139 = vrot.lane.b32.xlu0 %v1134, 127
    %v1140 = vpop.permute.xlu0 %1139
    %v1143 = vadd.f32 %v1115, %v1138
    %v1144 = vadd.f32 %v1116, %v1140
    %v1145 = vsub.f32 0.0, %v1143
    %v1146 = vsub.f32 0.0, %v1144
    %v1147 = vadd.f32 %v440, %v987
    %v1148 = vadd.f32 %v441, %v988
    %v1149 = vadd.f32 %v719, %v1031
    %v1150 = vadd.f32 %v720, %v1032
    %v1151 = vadd.f32 %v1149, %v1145
    %v1152 = vadd.f32 %v1150, %v1146
    %1155 = vrot.lane.b32.xlu0 %v1151, 64
    %v1156 = vpop.permute.xlu0 %1155
    %1157 = vrot.lane.b32.xlu0 %v1152, 64
    %v1158 = vpop.permute.xlu0 %1157
    %1163 = vrot.lane.b32.xlu0 %v1145, 70
    %v1164 = vpop.permute.xlu0 %1163
    %1165 = vrot.lane.b32.xlu0 %v1146, 70
    %v1166 = vpop.permute.xlu0 %1165
    %1171 = vrot.lane.b32.xlu0 %v331, 7
    %v1172 = vpop.permute.xlu0 %1171
    %1173 = vrot.lane.b32.xlu0 %v332, 7
    %v1174 = vpop.permute.xlu0 %1173
    %1177 = vrot.lane.b32.xlu0 %v343, 7
    %v1178 = vpop.permute.xlu0 %1177
    %1179 = vrot.lane.b32.xlu0 %v344, 7
    %v1180 = vpop.permute.xlu0 %1179
    %vm1183 = vcmask 7168
    %v1184 = vsel %vm1183, %v1156, %v1031
    %v1185 = vsel %vm1183, %v1158, %v1032
    %vm1186 = vcmask 15360
    %v1187 = vsel %vm1186, %v1184, %v719
    %v1188 = vsel %vm1186, %v1185, %v720
    %vm1189 = vcmask 23552
    %v1190 = vsel %vm1189, %v1187, %v440
    %v1191 = vsel %vm1189, %v1188, %v441
    %vm1192 = vcmask 31744
    %v1193 = vsel %vm1192, %v1190, %v556
    %v1194 = vsel %vm1192, %v1191, %v557
    %vm1195 = vcmask 39936
    %v1196 = vsel %vm1195, %v1193, %v1147
    %v1197 = vsel %vm1195, %v1194, %v1148
    %vm1198 = vcmask 48128
    %v1199 = vsel %vm1198, %v1196, %v1164
    %v1200 = vsel %vm1198, %v1197, %v1166
    %vm1201 = vcmask 56320
    %v1202 = vsel %vm1201, %v1199, %v1172
    %v1203 = vsel %vm1201, %v1200, %v1174
    %vm1204 = vcmask 64512
    %v1205 = vsel %vm1204, %v1202, %v1178
    %v1206 = vsel %vm1204, %v1203, %v1180
    %vm1207 = vcmask 72704
    %v1208 = vsel %vm1207, %v1205, 0.0
    %v1209 = vsel %vm1207, %v1206, 0.0
    %1210 = vst [vmem:[%s3] sm:$0xff] %v1208
    %1211 = vst [vmem:[%s3 + $0x8] sm:$0xff] %v1209
    // Predicated region
    $region18: #{sbdfc_forward.1} parent=1 // pred_check
      _
    $region19: #{sbdfc_forward.1} parent=1 // pred_check_branch
      %1213 = sbr.rel (0) target = $region21
    $region20: #{sbdfc_forward.1} parent=1 // pred_region
      _
    $region21: #{sbdfc_forward.1} parent=1 // pred_fallthru
      _
    // Predicated region
    $region22: #{sbdfc_forward.1} parent=1 // pred_check
      _
    $region23: #{sbdfc_forward.1} parent=1 // pred_check_branch
      %1215 = sbr.rel (0) target = $region25
    $region24: #{sbdfc_forward.1} parent=1 // pred_region
      _
    $region25: #{sbdfc_forward.1} parent=1 // pred_fallthru
      _
    %1216 = vsyncpa [#allocation3], 1

</llo_original>
